<compile_context>
chip_gen: v6e
topology: v6e:2x2x1
jax: 0.10.0
libtpu: 0.0.40
codegen_flags: <defaults>
</compile_context>

<pallas_src>
import jax
import jax.numpy as jnp
from jax.experimental import pallas as pl
from jax.experimental.pallas import tpu as pltpu

EPS = 1e-5
H1, H2, H3 = 512, 128, 64
H3_PAD = 128       # layer-3 width padded to a full lane width
OUT_PAD = 128      # output logits padded to a full lane width (lane-dense store)
PACK_W = 512       # packed per-feature parameter row width


def multiclass_kernel(x_ref, w1_ref, w2_ref, w3_ref, wo_ref, p_ref, o_ref):
    """Fused 4-layer MLP with training-mode BatchNorm1d + ReLU.

    Packed params p_ref (f32, (8, PACK_W)):
      row 0: gamma1 (512)            row 1: beta1 (512)
      row 2: gamma2 (128), 0-pad     row 3: beta2 (128), 0-pad
      row 4: gamma3 (64 -> 128 pad)  row 5: beta3 (64 -> 128 pad)
      row 6: bias_out (C -> 128 pad) row 7: zeros
    """
    B = x_ref.shape[0]
    inv_b = 1.0 / B
    ones_row = jnp.ones((1, B), jnp.float32)

    def bn_relu(h, g, b):
        # Batch stats on the MXU: (1,B) @ (B,F) column sums (frees the XLU),
        # one-pass variance E[h^2] - mu^2, fused affine into scale/shift.
        s1 = jnp.dot(ones_row, h, preferred_element_type=jnp.float32)
        s2 = jnp.dot(ones_row, h * h, preferred_element_type=jnp.float32)
        mu = s1 * inv_b
        var = jnp.maximum(s2 * inv_b - mu * mu, 0.0)
        scale = g * jax.lax.rsqrt(var + EPS)     # (1, F)
        shift = b - mu * scale                   # (1, F)
        return jnp.maximum(h * scale + shift, 0.0)

    # Layer 1: (B,F) @ (F,512); bf16 MXU inputs, f32 accumulate.
    h = jnp.dot(x_ref[...].astype(jnp.bfloat16), w1_ref[...],
                preferred_element_type=jnp.float32)
    h = bn_relu(h, p_ref[0:1, :], p_ref[1:2, :])

    # Layer 2: (B,512) @ (512,128)
    h = jnp.dot(h.astype(jnp.bfloat16), w2_ref[...],
                preferred_element_type=jnp.float32)
    h = bn_relu(h, p_ref[2:3, :H2], p_ref[3:4, :H2])

    # Layer 3: (B,128) @ (128,128); columns 64..127 are zero padding and stay
    # exactly zero through BN+ReLU because gamma/beta are zero-padded.
    h = jnp.dot(h.astype(jnp.bfloat16), w3_ref[...],
                preferred_element_type=jnp.float32)
    h = bn_relu(h, p_ref[4:5, :H3_PAD], p_ref[5:6, :H3_PAD])

    # Output layer: (B,128) @ (128,128); lane-dense (B,128) store, real logits
    # are columns [:C] (sliced in the wrapper).
    out = jnp.dot(h.astype(jnp.bfloat16), wo_ref[...],
                  preferred_element_type=jnp.float32)
    o_ref[...] = (out + p_ref[6:7, :OUT_PAD]).astype(o_ref.dtype)


def pack_params(p):
    """Pack per-feature vectors into one (8, PACK_W) f32 array; cast / pad the
    weight matrices for the kernel (bf16 weights, zero-padded layer-3/out)."""
    def row(v):
        v = jnp.reshape(v, (-1,)).astype(jnp.float32)
        return jnp.pad(v, (0, PACK_W - v.shape[0]))

    packed = jnp.stack([
        row(p["g1"]), row(p["be1"]),
        row(p["g2"]), row(p["be2"]),
        row(p["g3"]), row(p["be3"]),
        row(p["bo"]),
        jnp.zeros((PACK_W,), jnp.float32),
    ], axis=0)

    C = p["wo"].shape[1]
    w3p = jnp.pad(p["w3"], ((0, 0), (0, H3_PAD - H3)))
    wop = jnp.pad(p["wo"], ((0, H3_PAD - H3), (0, OUT_PAD - C)))
    return (p["w1"].astype(jnp.bfloat16),
            p["w2"].astype(jnp.bfloat16),
            w3p.astype(jnp.bfloat16),
            wop.astype(jnp.bfloat16),
            packed)


@jax.jit
def multiclass_forward(x, params):
    """x: (B, F) float32. Returns logits (B, C)."""
    B = x.shape[0]
    C = params["wo"].shape[1]
    w1, w2, w3p, wop, packed = pack_params(params)

    # Scoped-VMEM budget: everything is resident at once (grid-less call, no
    # double-buffering), so size the limit from the actual footprint.
    act_bytes = 4 * B * (H1 + 2 * H3_PAD + OUT_PAD)        # f32 activations
    in_bytes = (x.size * x.dtype.itemsize
                + sum(a.size * a.dtype.itemsize
                      for a in (w1, w2, w3p, wop, packed)))
    vmem_limit = int(min(max(2 * (act_bytes + in_bytes) + (4 << 20), 16 << 20),
                         64 << 20))
    # TODO(synk): for batches whose activations exceed VMEM, tile the batch
    # dim with a grid and a two-pass (accumulate stats, then normalize) BN
    # pipeline; whole-batch BN statistics forbid naive per-tile normalization.

    vmem = pltpu.MemorySpace.VMEM
    out = pl.pallas_call(
        multiclass_kernel,
        out_shape=jax.ShapeDtypeStruct((B, OUT_PAD), jnp.float32),
        in_specs=[pl.BlockSpec(memory_space=vmem)] * 6,
        out_specs=pl.BlockSpec(memory_space=vmem),
        compiler_params=pltpu.CompilerParams(vmem_limit_bytes=vmem_limit),
    )(x, w1, w2, w3p, wop, packed)
    return out[:, :C]


# ---------------------------------------------------------------------------
# deterministic parameter init (mimics PyTorch nn.Linear default init ranges)
# ---------------------------------------------------------------------------
def _init_linear(key, fan_in, fan_out):
    kw, kb = jax.random.split(key)
    bound = 1.0 / float(fan_in) ** 0.5
    w = jax.random.uniform(kw, (fan_in, fan_out), jnp.float32, -bound, bound)
    b = jax.random.uniform(kb, (1, fan_out), jnp.float32, -bound, bound)
    return w, b


def init_params(key, num_feature, num_class):
    k1, k2, k3, k4 = jax.random.split(key, 4)
    w1, b1 = _init_linear(k1, num_feature, H1)
    w2, b2 = _init_linear(k2, H1, H2)
    w3, b3 = _init_linear(k3, H2, H3)
    wo, bo = _init_linear(k4, H3, num_class)
    ones, zeros = jnp.ones, jnp.zeros
    return {
        "w1": w1, "b1": b1, "g1": ones((1, H1), jnp.float32), "be1": zeros((1, H1), jnp.float32),
        "w2": w2, "b2": b2, "g2": ones((1, H2), jnp.float32), "be2": zeros((1, H2), jnp.float32),
        "w3": w3, "b3": b3, "g3": ones((1, H3), jnp.float32), "be3": zeros((1, H3), jnp.float32),
        "wo": wo, "bo": bo,
    }


def reference_forward(x, p, dot_dtype=jnp.float32):
    """Pure-JAX PyTorch-equivalent forward (with biases, two-pass variance)."""
    def dot(a, w):
        return jnp.dot(a.astype(dot_dtype), w.astype(dot_dtype),
                       preferred_element_type=jnp.float32)

    def bn_relu(h, g, b):
        mu = jnp.mean(h, axis=0, keepdims=True)
        var = jnp.mean((h - mu) ** 2, axis=0, keepdims=True)
        return jnp.maximum((h - mu) / jnp.sqrt(var + EPS) * g + b, 0.0)

    h = bn_relu(dot(x, p["w1"]) + p["b1"], p["g1"], p["be1"])
    h = bn_relu(dot(h, p["w2"]) + p["b2"], p["g2"], p["be2"])
    h = bn_relu(dot(h, p["w3"]) + p["b3"], p["g3"], p["be3"])
    return dot(h, p["wo"]) + p["bo"]


if __name__ == "__main__":
    num_feature, num_class, batch = 32, 10, 8
    key = jax.random.PRNGKey(0)
    kx, kp = jax.random.split(key)
    x = jax.random.normal(kx, (batch, num_feature), jnp.float32)
    params = init_params(kp, num_feature, num_class)

    out = multiclass_forward(x, params)
    out = jax.block_until_ready(out)
    assert out.shape == (batch, num_class)

    # Check vs a reference that feeds the matmuls the same bf16 inputs.
    ref_bf16 = reference_forward(x, params, dot_dtype=jnp.bfloat16)
    assert jnp.allclose(out, ref_bf16, atol=1e-2, rtol=1e-2), "mismatch vs bf16 reference"

    # Loose sanity check vs the full-f32 PyTorch-equivalent math.
    ref_f32 = reference_forward(x, params, dot_dtype=jnp.float32)
    assert jnp.allclose(out, ref_f32, atol=1.5e-1, rtol=1e-1), "mismatch vs f32 reference"

    print("KERNEL_OK")
</pallas_src>

<mosaic_0001>
module attributes {stable_mosaic.version = 11 : i64} {
  func.func @multiclass_kernel(%arg0: memref<8x32xf32, #tpu.memory_space<vmem>>, %arg1: memref<32x512xbf16, #tpu.memory_space<vmem>>, %arg2: memref<512x128xbf16, #tpu.memory_space<vmem>>, %arg3: memref<128x128xbf16, #tpu.memory_space<vmem>>, %arg4: memref<128x128xbf16, #tpu.memory_space<vmem>>, %arg5: memref<8x512xf32, #tpu.memory_space<vmem>>, %arg6: memref<8x128xf32, #tpu.memory_space<vmem>>) attributes {dimension_semantics = [], scalar_prefetch = 0 : i64, scratch_operands = 0 : i64, tpu.core_type = #tpu.core_type<tc>} {
    %cst = arith.constant 1.000000e+00 : f32
    %0 = vector.broadcast %cst : f32 to vector<1x8xf32>
    %c0 = arith.constant 0 : index
    %c0_0 = arith.constant 0 : index
    %1 = vector.load %arg0[%c0, %c0_0] : memref<8x32xf32, #tpu.memory_space<vmem>>, vector<8x32xf32>
    %2 = arith.truncf %1 : vector<8x32xf32> to vector<8x32xbf16>
    %c0_1 = arith.constant 0 : index
    %c0_2 = arith.constant 0 : index
    %3 = vector.load %arg1[%c0_1, %c0_2] : memref<32x512xbf16, #tpu.memory_space<vmem>>, vector<32x512xbf16>
    %cst_3 = arith.constant dense<0.000000e+00> : vector<8x512xf32>
    %4 = tpu.matmul %2, %3, %cst_3 {dimension_numbers = #tpu.dot_dimension_numbers<[1], [0], [0], [1], [0, 0, 1, 1], [], []>} : vector<8x32xbf16>, vector<32x512xbf16>, vector<8x512xf32> -> vector<8x512xf32>
    %c0_4 = arith.constant 0 : index
    %c0_5 = arith.constant 0 : index
    %5 = vector.load %arg5[%c0_4, %c0_5] : memref<8x512xf32, #tpu.memory_space<vmem>>, vector<1x512xf32>
    %c1 = arith.constant 1 : index
    %c0_6 = arith.constant 0 : index
    %6 = vector.load %arg5[%c1, %c0_6] : memref<8x512xf32, #tpu.memory_space<vmem>>, vector<1x512xf32>
    %cst_7 = arith.constant dense<0.000000e+00> : vector<1x512xf32>
    %7 = tpu.matmul %0, %4, %cst_7 {dimension_numbers = #tpu.dot_dimension_numbers<[1], [0], [0], [1], [0, 0, 1, 1], [], []>} : vector<1x8xf32>, vector<8x512xf32>, vector<1x512xf32> -> vector<1x512xf32>
    %8 = arith.mulf %4, %4 : vector<8x512xf32>
    %cst_8 = arith.constant dense<0.000000e+00> : vector<1x512xf32>
    %9 = tpu.matmul %0, %8, %cst_8 {dimension_numbers = #tpu.dot_dimension_numbers<[1], [0], [0], [1], [0, 0, 1, 1], [], []>} : vector<1x8xf32>, vector<8x512xf32>, vector<1x512xf32> -> vector<1x512xf32>
    %cst_9 = arith.constant 1.250000e-01 : f32
    %10 = vector.broadcast %cst_9 : f32 to vector<1x512xf32>
    %11 = arith.mulf %7, %10 : vector<1x512xf32>
    %cst_10 = arith.constant 1.250000e-01 : f32
    %12 = vector.broadcast %cst_10 : f32 to vector<1x512xf32>
    %13 = arith.mulf %9, %12 : vector<1x512xf32>
    %14 = arith.mulf %11, %11 : vector<1x512xf32>
    %15 = arith.subf %13, %14 : vector<1x512xf32>
    %cst_11 = arith.constant 0.000000e+00 : f32
    %16 = vector.broadcast %cst_11 : f32 to vector<1x512xf32>
    %17 = arith.maximumf %15, %16 : vector<1x512xf32>
    %cst_12 = arith.constant 9.99999974E-6 : f32
    %18 = vector.broadcast %cst_12 : f32 to vector<1x512xf32>
    %19 = arith.addf %17, %18 : vector<1x512xf32>
    %20 = math.rsqrt %19 : vector<1x512xf32>
    %21 = arith.mulf %5, %20 : vector<1x512xf32>
    %22 = arith.mulf %11, %21 : vector<1x512xf32>
    %23 = arith.subf %6, %22 : vector<1x512xf32>
    %24 = vector.broadcast %21 : vector<1x512xf32> to vector<8x512xf32>
    %25 = arith.mulf %4, %24 : vector<8x512xf32>
    %26 = vector.broadcast %23 : vector<1x512xf32> to vector<8x512xf32>
    %27 = arith.addf %25, %26 : vector<8x512xf32>
    %cst_13 = arith.constant 0.000000e+00 : f32
    %28 = vector.broadcast %cst_13 : f32 to vector<8x512xf32>
    %29 = arith.maximumf %27, %28 : vector<8x512xf32>
    %30 = arith.truncf %29 : vector<8x512xf32> to vector<8x512xbf16>
    %c0_14 = arith.constant 0 : index
    %c0_15 = arith.constant 0 : index
    %31 = vector.load %arg2[%c0_14, %c0_15] : memref<512x128xbf16, #tpu.memory_space<vmem>>, vector<512x128xbf16>
    %cst_16 = arith.constant dense<0.000000e+00> : vector<8x128xf32>
    %32 = tpu.matmul %30, %31, %cst_16 {dimension_numbers = #tpu.dot_dimension_numbers<[1], [0], [0], [1], [0, 0, 1, 1], [], []>} : vector<8x512xbf16>, vector<512x128xbf16>, vector<8x128xf32> -> vector<8x128xf32>
    %c2 = arith.constant 2 : index
    %c0_17 = arith.constant 0 : index
    %33 = vector.load %arg5[%c2, %c0_17] : memref<8x512xf32, #tpu.memory_space<vmem>>, vector<1x128xf32>
    %c3 = arith.constant 3 : index
    %c0_18 = arith.constant 0 : index
    %34 = vector.load %arg5[%c3, %c0_18] : memref<8x512xf32, #tpu.memory_space<vmem>>, vector<1x128xf32>
    %cst_19 = arith.constant dense<0.000000e+00> : vector<1x128xf32>
    %35 = tpu.matmul %0, %32, %cst_19 {dimension_numbers = #tpu.dot_dimension_numbers<[1], [0], [0], [1], [0, 0, 1, 1], [], []>} : vector<1x8xf32>, vector<8x128xf32>, vector<1x128xf32> -> vector<1x128xf32>
    %36 = arith.mulf %32, %32 : vector<8x128xf32>
    %cst_20 = arith.constant dense<0.000000e+00> : vector<1x128xf32>
    %37 = tpu.matmul %0, %36, %cst_20 {dimension_numbers = #tpu.dot_dimension_numbers<[1], [0], [0], [1], [0, 0, 1, 1], [], []>} : vector<1x8xf32>, vector<8x128xf32>, vector<1x128xf32> -> vector<1x128xf32>
    %cst_21 = arith.constant 1.250000e-01 : f32
    %38 = vector.broadcast %cst_21 : f32 to vector<1x128xf32>
    %39 = arith.mulf %35, %38 : vector<1x128xf32>
    %cst_22 = arith.constant 1.250000e-01 : f32
    %40 = vector.broadcast %cst_22 : f32 to vector<1x128xf32>
    %41 = arith.mulf %37, %40 : vector<1x128xf32>
    %42 = arith.mulf %39, %39 : vector<1x128xf32>
    %43 = arith.subf %41, %42 : vector<1x128xf32>
    %cst_23 = arith.constant 0.000000e+00 : f32
    %44 = vector.broadcast %cst_23 : f32 to vector<1x128xf32>
    %45 = arith.maximumf %43, %44 : vector<1x128xf32>
    %cst_24 = arith.constant 9.99999974E-6 : f32
    %46 = vector.broadcast %cst_24 : f32 to vector<1x128xf32>
    %47 = arith.addf %45, %46 : vector<1x128xf32>
    %48 = math.rsqrt %47 : vector<1x128xf32>
    %49 = arith.mulf %33, %48 : vector<1x128xf32>
    %50 = arith.mulf %39, %49 : vector<1x128xf32>
    %51 = arith.subf %34, %50 : vector<1x128xf32>
    %52 = vector.broadcast %49 : vector<1x128xf32> to vector<8x128xf32>
    %53 = arith.mulf %32, %52 : vector<8x128xf32>
    %54 = vector.broadcast %51 : vector<1x128xf32> to vector<8x128xf32>
    %55 = arith.addf %53, %54 : vector<8x128xf32>
    %cst_25 = arith.constant 0.000000e+00 : f32
    %56 = vector.broadcast %cst_25 : f32 to vector<8x128xf32>
    %57 = arith.maximumf %55, %56 : vector<8x128xf32>
    %58 = arith.truncf %57 : vector<8x128xf32> to vector<8x128xbf16>
    %c0_26 = arith.constant 0 : index
    %c0_27 = arith.constant 0 : index
    %59 = vector.load %arg3[%c0_26, %c0_27] : memref<128x128xbf16, #tpu.memory_space<vmem>>, vector<128x128xbf16>
    %cst_28 = arith.constant dense<0.000000e+00> : vector<8x128xf32>
    %60 = tpu.matmul %58, %59, %cst_28 {dimension_numbers = #tpu.dot_dimension_numbers<[1], [0], [0], [1], [0, 0, 1, 1], [], []>} : vector<8x128xbf16>, vector<128x128xbf16>, vector<8x128xf32> -> vector<8x128xf32>
    %c4 = arith.constant 4 : index
    %c0_29 = arith.constant 0 : index
    %61 = vector.load %arg5[%c4, %c0_29] : memref<8x512xf32, #tpu.memory_space<vmem>>, vector<1x128xf32>
    %c5 = arith.constant 5 : index
    %c0_30 = arith.constant 0 : index
    %62 = vector.load %arg5[%c5, %c0_30] : memref<8x512xf32, #tpu.memory_space<vmem>>, vector<1x128xf32>
    %cst_31 = arith.constant dense<0.000000e+00> : vector<1x128xf32>
    %63 = tpu.matmul %0, %60, %cst_31 {dimension_numbers = #tpu.dot_dimension_numbers<[1], [0], [0], [1], [0, 0, 1, 1], [], []>} : vector<1x8xf32>, vector<8x128xf32>, vector<1x128xf32> -> vector<1x128xf32>
    %64 = arith.mulf %60, %60 : vector<8x128xf32>
    %cst_32 = arith.constant dense<0.000000e+00> : vector<1x128xf32>
    %65 = tpu.matmul %0, %64, %cst_32 {dimension_numbers = #tpu.dot_dimension_numbers<[1], [0], [0], [1], [0, 0, 1, 1], [], []>} : vector<1x8xf32>, vector<8x128xf32>, vector<1x128xf32> -> vector<1x128xf32>
    %cst_33 = arith.constant 1.250000e-01 : f32
    %66 = vector.broadcast %cst_33 : f32 to vector<1x128xf32>
    %67 = arith.mulf %63, %66 : vector<1x128xf32>
    %cst_34 = arith.constant 1.250000e-01 : f32
    %68 = vector.broadcast %cst_34 : f32 to vector<1x128xf32>
    %69 = arith.mulf %65, %68 : vector<1x128xf32>
    %70 = arith.mulf %67, %67 : vector<1x128xf32>
    %71 = arith.subf %69, %70 : vector<1x128xf32>
    %cst_35 = arith.constant 0.000000e+00 : f32
    %72 = vector.broadcast %cst_35 : f32 to vector<1x128xf32>
    %73 = arith.maximumf %71, %72 : vector<1x128xf32>
    %cst_36 = arith.constant 9.99999974E-6 : f32
    %74 = vector.broadcast %cst_36 : f32 to vector<1x128xf32>
    %75 = arith.addf %73, %74 : vector<1x128xf32>
    %76 = math.rsqrt %75 : vector<1x128xf32>
    %77 = arith.mulf %61, %76 : vector<1x128xf32>
    %78 = arith.mulf %67, %77 : vector<1x128xf32>
    %79 = arith.subf %62, %78 : vector<1x128xf32>
    %80 = vector.broadcast %77 : vector<1x128xf32> to vector<8x128xf32>
    %81 = arith.mulf %60, %80 : vector<8x128xf32>
    %82 = vector.broadcast %79 : vector<1x128xf32> to vector<8x128xf32>
    %83 = arith.addf %81, %82 : vector<8x128xf32>
    %cst_37 = arith.constant 0.000000e+00 : f32
    %84 = vector.broadcast %cst_37 : f32 to vector<8x128xf32>
    %85 = arith.maximumf %83, %84 : vector<8x128xf32>
    %86 = arith.truncf %85 : vector<8x128xf32> to vector<8x128xbf16>
    %c0_38 = arith.constant 0 : index
    %c0_39 = arith.constant 0 : index
    %87 = vector.load %arg4[%c0_38, %c0_39] : memref<128x128xbf16, #tpu.memory_space<vmem>>, vector<128x128xbf16>
    %cst_40 = arith.constant dense<0.000000e+00> : vector<8x128xf32>
    %88 = tpu.matmul %86, %87, %cst_40 {dimension_numbers = #tpu.dot_dimension_numbers<[1], [0], [0], [1], [0, 0, 1, 1], [], []>} : vector<8x128xbf16>, vector<128x128xbf16>, vector<8x128xf32> -> vector<8x128xf32>
    %c6 = arith.constant 6 : index
    %c0_41 = arith.constant 0 : index
    %89 = vector.load %arg5[%c6, %c0_41] : memref<8x512xf32, #tpu.memory_space<vmem>>, vector<1x128xf32>
    %90 = vector.broadcast %89 : vector<1x128xf32> to vector<8x128xf32>
    %91 = arith.addf %88, %90 : vector<8x128xf32>
    %c0_42 = arith.constant 0 : index
    %c0_43 = arith.constant 0 : index
    %92 = vector.load %arg6[%c0_42, %c0_43] : memref<8x128xf32, #tpu.memory_space<vmem>>, vector<8x128xf32>
    tpu.vector_store %arg6[%c0_42, %c0_43], %91 {strides = array<i32>} : memref<8x128xf32, #tpu.memory_space<vmem>>, vector<8x128xf32>,
    return
  }
}

</mosaic_0001>

<llo_original>
// kernel: multiclass_forward.1
$region0: #{multiclass_forward.1}
  #allocation0 [shape = 'u32[]', space=smem, size = 0x4, offset = 0x4, fixed_abs, tag = 'smem constant byte address 0x4 - core index']
  #allocation1 [shape = 'u32[144,128]{1,0:T(1,128)}', space=vmem, size = 0x12000, scoped, tag = 'internal scratch']
  %s0 = inlined_call_operand.vmem [shape: f32[8,32], index: 0, kind: input, shape index: {}]
  %s1 = inlined_call_operand.vmem [shape: bf16[32,512], index: 1, kind: input, shape index: {}]
  %s2 = inlined_call_operand.vmem [shape: bf16[512,128], index: 2, kind: input, shape index: {}]
  %s3 = inlined_call_operand.vmem [shape: bf16[128,128], index: 3, kind: input, shape index: {}]
  %s4 = inlined_call_operand.vmem [shape: bf16[128,128], index: 4, kind: input, shape index: {}]
  %s5 = inlined_call_operand.vmem [shape: f32[8,512], index: 5, kind: input, shape index: {}]
  %s6 = inlined_call_operand.hbm [shape: f32[8,128], index: 6, kind: output, shape index: {}]
  %s7 = sld [smem:[#allocation0]]
  $region34: #{multiclass_forward.1} parent=0
    _
  %s9 = ssub.s32 1, %s7
  %s10 = scalar_select 0, %s9, %s7
  $region1: #{multiclass_forward.1} parent=0
    #allocation2 [shape = 'u8[4096]{0}', space=vmem, size = 0x1000, scoped, tag = 'output window, operand 0, single buffered']
    #allocation3 [shape = 's32[1]{0}', space=sflag, size = 0x4, scoped, tag = 'scoped memory for multiclass_forward.1']
    %11 = vsyncpa [#allocation3], 0
    // Predicated region
    $region2: #{multiclass_forward.1} parent=1 // pred_check
      _
    $region3: #{multiclass_forward.1} parent=1 // pred_check_branch
      %13 = sbr.rel (0) target = $region5
    $region4: #{multiclass_forward.1} parent=1 // pred_region
      _
    $region5: #{multiclass_forward.1} parent=1 // pred_fallthru
      _
    // Predicated region
    $region6: #{multiclass_forward.1} parent=1 // pred_check
      _
    $region7: #{multiclass_forward.1} parent=1 // pred_check_branch
      %15 = sbr.rel (0) target = $region9
    $region8: #{multiclass_forward.1} parent=1 // pred_region
      _
    $region9: #{multiclass_forward.1} parent=1 // pred_fallthru
      _
    // Predicated region
    $region10: #{multiclass_forward.1} parent=1 // pred_check
      _
    $region11: #{multiclass_forward.1} parent=1 // pred_check_branch
      %17 = sbr.rel (0) target = $region13
    $region12: #{multiclass_forward.1} parent=1 // pred_region
      _
    $region13: #{multiclass_forward.1} parent=1 // pred_fallthru
      _
    // Predicated region
    $region14: #{multiclass_forward.1} parent=1 // pred_check
      _
    $region15: #{multiclass_forward.1} parent=1 // pred_check_branch
      %19 = sbr.rel (0) target = $region17
    $region16: #{multiclass_forward.1} parent=1 // pred_region
      _
    $region17: #{multiclass_forward.1} parent=1 // pred_fallthru
      _
    // Predicated region
    $region18: #{multiclass_forward.1} parent=1 // pred_check
      _
    $region19: #{multiclass_forward.1} parent=1 // pred_check_branch
      %21 = sbr.rel (0) target = $region21
    $region20: #{multiclass_forward.1} parent=1 // pred_region
      _
    $region21: #{multiclass_forward.1} parent=1 // pred_fallthru
      _
    // Predicated region
    $region22: #{multiclass_forward.1} parent=1 // pred_check
      _
    $region23: #{multiclass_forward.1} parent=1 // pred_check_branch
      %23 = sbr.rel (0) target = $region25
    $region24: #{multiclass_forward.1} parent=1 // pred_region
      _
    $region25: #{multiclass_forward.1} parent=1 // pred_fallthru
      _
    %v25 = vld [vmem:[%s0] sm:$0xff]
    %v26 = vpack.c.bf16 %v25, %v25
    %v27 = vld [vmem:[%s1] sm:$0xff]
    %v28 = vld [vmem:[%s1 + $0x8] sm:$0xff]
    %v29 = vld [vmem:[%s1 + $0x10] sm:$0xff]
    %v30 = vld [vmem:[%s1 + $0x18] sm:$0xff]
    %v31 = vld [vmem:[%s1 + $0x20] sm:$0xff]
    %v32 = vld [vmem:[%s1 + $0x28] sm:$0xff]
    %v33 = vld [vmem:[%s1 + $0x30] sm:$0xff]
    %v34 = vld [vmem:[%s1 + $0x38] sm:$0xff]
    %v43 = vunpack.c.l.b16 %v27
    %v44 = vunpack.c.h.b16 %v27
    %v45 = vunpack.c.l.b16 %v28
    %v46 = vunpack.c.h.b16 %v28
    %v47 = vunpack.c.l.b16 %v29
    %v48 = vunpack.c.h.b16 %v29
    %v49 = vunpack.c.l.b16 %v30
    %v50 = vunpack.c.h.b16 %v30
    %v51 = vunpack.c.l.b16 %v31
    %v52 = vunpack.c.h.b16 %v31
    %v53 = vunpack.c.l.b16 %v32
    %v54 = vunpack.c.h.b16 %v32
    %v55 = vunpack.c.l.b16 %v33
    %v56 = vunpack.c.h.b16 %v33
    %v57 = vunpack.c.l.b16 %v34
    %v58 = vunpack.c.h.b16 %v34
    %v59 = vpack.c.b16 %v47, %v43
    %v60 = vpack.c.b16 %v48, %v44
    %v61 = vpack.c.b16 %v49, %v45
    %v62 = vpack.c.b16 %v50, %v46
    %v63 = vpack.c.b16 %v55, %v51
    %v64 = vpack.c.b16 %v56, %v52
    %v65 = vpack.c.b16 %v57, %v53
    %v66 = vpack.c.b16 %v58, %v54
    %vm75 = vcmask 261120
    %v77 = vsel %vm75, %v26, 0
    %79 = vmatprep.subr.bf16.mxu0 0
    %80 = vmatpush1.bf16.msra.mxu0 0
    %81 = vmatprep.subr.bf16.mxu0 0
    %82 = vmatpush1.bf16.msra.mxu0 0
    %83 = vmatprep.subr.bf16.mxu0 0
    %84 = vmatpush1.bf16.msra.mxu0 0
    %85 = vmatprep.subr.bf16.mxu0 0
    %86 = vmatpush1.bf16.msra.mxu0 0
    %87 = vmatprep.subr.bf16.mxu0 0
    %88 = vmatpush1.bf16.msra.mxu0 0
    %89 = vmatprep.subr.bf16.mxu0 0
    %90 = vmatpush1.bf16.msra.mxu0 0
    %91 = vmatprep.subr.bf16.mxu0 %v64
    %92 = vmatpush1.bf16.msra.mxu0 %v63
    %93 = vmatprep.subr.bf16.mxu0 %v60
    %94 = vmatpush1.bf16.msra.mxu0 %v59
    %95 = vmatprep.subr.bf16.mxu0 0
    %96 = vmatpush2.bf16.msra.mxu0 0
    %97 = vmatprep.subr.bf16.mxu0 0
    %98 = vmatpush2.bf16.msra.mxu0 0
    %99 = vmatprep.subr.bf16.mxu0 0
    %100 = vmatpush2.bf16.msra.mxu0 0
    %101 = vmatprep.subr.bf16.mxu0 0
    %102 = vmatpush2.bf16.msra.mxu0 0
    %103 = vmatprep.subr.bf16.mxu0 0
    %104 = vmatpush2.bf16.msra.mxu0 0
    %105 = vmatprep.subr.bf16.mxu0 0
    %106 = vmatpush2.bf16.msra.mxu0 0
    %107 = vmatprep.subr.bf16.mxu0 0
    %108 = vmatpush2.bf16.msra.mxu0 0
    %109 = vmatprep.subr.bf16.mxu0 0
    %110 = vmatpush2.bf16.msra.mxu0 0
    %111 = vmatprep.mubr.bf16.mxu0 0
    %112 = vmatmul.mubr.bf16.gmra.mxu0 %v77
    %v113 = vpop.f32.mrf.mxu0
    %v114 = vadd.f32 0.0, %v113
    %v115 = vpop.f32.mrf.mxu0
    %v116 = vadd.f32 0.0, %v115
    %v117 = vpop.f32.mrf.mxu0
    %v118 = vpop.f32.mrf.mxu0
    %119 = vdwg.mxu0
    %120 = vmatprep.subr.bf16.mxu0 0
    %121 = vmatpush1.bf16.msra.mxu0 0
    %122 = vmatprep.subr.bf16.mxu0 0
    %123 = vmatpush1.bf16.msra.mxu0 0
    %124 = vmatprep.subr.bf16.mxu0 0
    %125 = vmatpush1.bf16.msra.mxu0 0
    %126 = vmatprep.subr.bf16.mxu0 0
    %127 = vmatpush1.bf16.msra.mxu0 0
    %128 = vmatprep.subr.bf16.mxu0 0
    %129 = vmatpush1.bf16.msra.mxu0 0
    %130 = vmatprep.subr.bf16.mxu0 0
    %131 = vmatpush1.bf16.msra.mxu0 0
    %132 = vmatprep.subr.bf16.mxu0 %v66
    %133 = vmatpush1.bf16.msra.mxu0 %v65
    %134 = vmatprep.subr.bf16.mxu0 %v62
    %135 = vmatpush1.bf16.msra.mxu0 %v61
    %136 = vmatprep.subr.bf16.mxu0 0
    %137 = vmatpush2.bf16.msra.mxu0 0
    %138 = vmatprep.subr.bf16.mxu0 0
    %139 = vmatpush2.bf16.msra.mxu0 0
    %140 = vmatprep.subr.bf16.mxu0 0
    %141 = vmatpush2.bf16.msra.mxu0 0
    %142 = vmatprep.subr.bf16.mxu0 0
    %143 = vmatpush2.bf16.msra.mxu0 0
    %144 = vmatprep.subr.bf16.mxu0 0
    %145 = vmatpush2.bf16.msra.mxu0 0
    %146 = vmatprep.subr.bf16.mxu0 0
    %147 = vmatpush2.bf16.msra.mxu0 0
    %148 = vmatprep.subr.bf16.mxu0 0
    %149 = vmatpush2.bf16.msra.mxu0 0
    %150 = vmatprep.subr.bf16.mxu0 0
    %151 = vmatpush2.bf16.msra.mxu0 0
    %152 = vmatprep.mubr.bf16.mxu0 0
    %153 = vmatmul.mubr.bf16.gmra.mxu0 %v77
    %v154 = vpop.f32.mrf.mxu0
    %v155 = vadd.f32 0.0, %v154
    %v156 = vpop.f32.mrf.mxu0
    %v157 = vadd.f32 0.0, %v156
    %v158 = vpop.f32.mrf.mxu0
    %v159 = vpop.f32.mrf.mxu0
    %160 = vdwg.mxu0
    %v161 = vld [vmem:[%s5] ss:$8 sm:$0xf]
    %s162 = scalar_lea.vmem %s5, 1
    %v163 = vld [vmem:[%s162] ss:$8 sm:$0xf]
    %vm164 = vcmask 64512
    %v166 = vsel %vm164, 1.0, 0
    %168 = vmatprep.subr.mxu0 0.0
    %169 = vmatpush1.msra.mxu0 0.0
    %170 = vmatprep.subr.mxu0 0.0
    %171 = vmatpush1.msra.mxu0 0.0
    %172 = vmatprep.subr.mxu0 0.0
    %173 = vmatpush1.msra.mxu0 0.0
    %174 = vmatprep.subr.mxu0 0.0
    %175 = vmatpush1.msra.mxu0 0.0
    %176 = vmatprep.subr.mxu0 0.0
    %177 = vmatpush1.msra.mxu0 0.0
    %178 = vmatprep.subr.mxu0 0.0
    %179 = vmatpush1.msra.mxu0 0.0
    %180 = vmatprep.subr.mxu0 0.0
    %181 = vmatpush1.msra.mxu0 0.0
    %182 = vmatprep.subr.mxu0 0.0
    %183 = vmatpush1.msra.mxu0 0.0
    %184 = vmatprep.subr.mxu0 0.0
    %185 = vmatpush1.msra.mxu0 0.0
    %186 = vmatprep.subr.mxu0 0.0
    %187 = vmatpush1.msra.mxu0 0.0
    %188 = vmatprep.subr.mxu0 0.0
    %189 = vmatpush1.msra.mxu0 0.0
    %190 = vmatprep.subr.mxu0 0.0
    %191 = vmatpush1.msra.mxu0 0.0
    %192 = vmatprep.subr.mxu0 0.0
    %193 = vmatpush1.msra.mxu0 0.0
    %194 = vmatprep.subr.mxu0 0.0
    %195 = vmatpush1.msra.mxu0 0.0
    %196 = vmatprep.subr.mxu0 0.0
    %197 = vmatpush1.msra.mxu0 0.0
    %198 = vmatprep.subr.mxu0 %v116
    %199 = vmatpush1.msra.mxu0 %v114
    %200 = vmatprep.subr.mxu0 0.0
    %201 = vmatpush2.msra.mxu0 0.0
    %202 = vmatprep.subr.mxu0 0.0
    %203 = vmatpush2.msra.mxu0 0.0
    %204 = vmatprep.subr.mxu0 0.0
    %205 = vmatpush2.msra.mxu0 0.0
    %206 = vmatprep.subr.mxu0 0.0
    %207 = vmatpush2.msra.mxu0 0.0
    %208 = vmatprep.subr.mxu0 0.0
    %209 = vmatpush2.msra.mxu0 0.0
    %210 = vmatprep.subr.mxu0 0.0
    %211 = vmatpush2.msra.mxu0 0.0
    %212 = vmatprep.subr.mxu0 0.0
    %213 = vmatpush2.msra.mxu0 0.0
    %214 = vmatprep.subr.mxu0 0.0
    %215 = vmatpush2.msra.mxu0 0.0
    %216 = vmatprep.subr.mxu0 0.0
    %217 = vmatpush2.msra.mxu0 0.0
    %218 = vmatprep.subr.mxu0 0.0
    %219 = vmatpush2.msra.mxu0 0.0
    %220 = vmatprep.subr.mxu0 0.0
    %221 = vmatpush2.msra.mxu0 0.0
    %222 = vmatprep.subr.mxu0 0.0
    %223 = vmatpush2.msra.mxu0 0.0
    %224 = vmatprep.subr.mxu0 0.0
    %225 = vmatpush2.msra.mxu0 0.0
    %226 = vmatprep.subr.mxu0 0.0
    %227 = vmatpush2.msra.mxu0 0.0
    %228 = vmatprep.subr.mxu0 0.0
    %229 = vmatpush2.msra.mxu0 0.0
    %230 = vmatprep.subr.mxu0 0.0
    %231 = vmatpush2.msra.mxu0 0.0
    %232 = vmatprep.mubr.f32.mxu0 0.0
    %233 = vmatmul.mubr.f32.gmra.mxu0 %v166
    %v234 = vpop.f32.mrf.mxu0
    %v235 = vadd.f32 0.0, %v234
    %v236 = vpop.f32.mrf.mxu0
    %v237 = vadd.f32 0.0, %v236
    %238 = vdwg.mxu0
    %239 = vmatprep.subr.mxu0 0.0
    %240 = vmatpush1.msra.mxu0 0.0
    %241 = vmatprep.subr.mxu0 0.0
    %242 = vmatpush1.msra.mxu0 0.0
    %243 = vmatprep.subr.mxu0 0.0
    %244 = vmatpush1.msra.mxu0 0.0
    %245 = vmatprep.subr.mxu0 0.0
    %246 = vmatpush1.msra.mxu0 0.0
    %247 = vmatprep.subr.mxu0 0.0
    %248 = vmatpush1.msra.mxu0 0.0
    %249 = vmatprep.subr.mxu0 0.0
    %250 = vmatpush1.msra.mxu0 0.0
    %251 = vmatprep.subr.mxu0 0.0
    %252 = vmatpush1.msra.mxu0 0.0
    %253 = vmatprep.subr.mxu0 0.0
    %254 = vmatpush1.msra.mxu0 0.0
    %255 = vmatprep.subr.mxu0 0.0
    %256 = vmatpush1.msra.mxu0 0.0
    %257 = vmatprep.subr.mxu0 0.0
    %258 = vmatpush1.msra.mxu0 0.0
    %259 = vmatprep.subr.mxu0 0.0
    %260 = vmatpush1.msra.mxu0 0.0
    %261 = vmatprep.subr.mxu0 0.0
    %262 = vmatpush1.msra.mxu0 0.0
    %263 = vmatprep.subr.mxu0 0.0
    %264 = vmatpush1.msra.mxu0 0.0
    %265 = vmatprep.subr.mxu0 0.0
    %266 = vmatpush1.msra.mxu0 0.0
    %267 = vmatprep.subr.mxu0 0.0
    %268 = vmatpush1.msra.mxu0 0.0
    %269 = vmatprep.subr.mxu0 %v157
    %270 = vmatpush1.msra.mxu0 %v155
    %271 = vmatprep.subr.mxu0 0.0
    %272 = vmatpush2.msra.mxu0 0.0
    %273 = vmatprep.subr.mxu0 0.0
    %274 = vmatpush2.msra.mxu0 0.0
    %275 = vmatprep.subr.mxu0 0.0
    %276 = vmatpush2.msra.mxu0 0.0
    %277 = vmatprep.subr.mxu0 0.0
    %278 = vmatpush2.msra.mxu0 0.0
    %279 = vmatprep.subr.mxu0 0.0
    %280 = vmatpush2.msra.mxu0 0.0
    %281 = vmatprep.subr.mxu0 0.0
    %282 = vmatpush2.msra.mxu0 0.0
    %283 = vmatprep.subr.mxu0 0.0
    %284 = vmatpush2.msra.mxu0 0.0
    %285 = vmatprep.subr.mxu0 0.0
    %286 = vmatpush2.msra.mxu0 0.0
    %287 = vmatprep.subr.mxu0 0.0
    %288 = vmatpush2.msra.mxu0 0.0
    %289 = vmatprep.subr.mxu0 0.0
    %290 = vmatpush2.msra.mxu0 0.0
    %291 = vmatprep.subr.mxu0 0.0
    %292 = vmatpush2.msra.mxu0 0.0
    %293 = vmatprep.subr.mxu0 0.0
    %294 = vmatpush2.msra.mxu0 0.0
    %295 = vmatprep.subr.mxu0 0.0
    %296 = vmatpush2.msra.mxu0 0.0
    %297 = vmatprep.subr.mxu0 0.0
    %298 = vmatpush2.msra.mxu0 0.0
    %299 = vmatprep.subr.mxu0 0.0
    %300 = vmatpush2.msra.mxu0 0.0
    %301 = vmatprep.subr.mxu0 0.0
    %302 = vmatpush2.msra.mxu0 0.0
    %303 = vmatprep.mubr.f32.mxu0 0.0
    %304 = vmatmul.mubr.f32.gmra.mxu0 %v166
    %v305 = vpop.f32.mrf.mxu0
    %v306 = vadd.f32 0.0, %v305
    %v307 = vpop.f32.mrf.mxu0
    %v308 = vadd.f32 0.0, %v307
    %309 = vdwg.mxu0
    %v310 = vmul.f32 %v114, %v114
    %v311 = vmul.f32 %v116, %v116
    %v312 = vmul.f32 %v155, %v155
    %v313 = vmul.f32 %v157, %v157
    %314 = vmatprep.subr.mxu0 0.0
    %315 = vmatpush1.msra.mxu0 0.0
    %316 = vmatprep.subr.mxu0 0.0
    %317 = vmatpush1.msra.mxu0 0.0
    %318 = vmatprep.subr.mxu0 0.0
    %319 = vmatpush1.msra.mxu0 0.0
    %320 = vmatprep.subr.mxu0 0.0
    %321 = vmatpush1.msra.mxu0 0.0
    %322 = vmatprep.subr.mxu0 0.0
    %323 = vmatpush1.msra.mxu0 0.0
    %324 = vmatprep.subr.mxu0 0.0
    %325 = vmatpush1.msra.mxu0 0.0
    %326 = vmatprep.subr.mxu0 0.0
    %327 = vmatpush1.msra.mxu0 0.0
    %328 = vmatprep.subr.mxu0 0.0
    %329 = vmatpush1.msra.mxu0 0.0
    %330 = vmatprep.subr.mxu0 0.0
    %331 = vmatpush1.msra.mxu0 0.0
    %332 = vmatprep.subr.mxu0 0.0
    %333 = vmatpush1.msra.mxu0 0.0
    %334 = vmatprep.subr.mxu0 0.0
    %335 = vmatpush1.msra.mxu0 0.0
    %336 = vmatprep.subr.mxu0 0.0
    %337 = vmatpush1.msra.mxu0 0.0
    %338 = vmatprep.subr.mxu0 0.0
    %339 = vmatpush1.msra.mxu0 0.0
    %340 = vmatprep.subr.mxu0 0.0
    %341 = vmatpush1.msra.mxu0 0.0
    %342 = vmatprep.subr.mxu0 0.0
    %343 = vmatpush1.msra.mxu0 0.0
    %344 = vmatprep.subr.mxu0 %v311
    %345 = vmatpush1.msra.mxu0 %v310
    %346 = vmatprep.subr.mxu0 0.0
    %347 = vmatpush2.msra.mxu0 0.0
    %348 = vmatprep.subr.mxu0 0.0
    %349 = vmatpush2.msra.mxu0 0.0
    %350 = vmatprep.subr.mxu0 0.0
    %351 = vmatpush2.msra.mxu0 0.0
    %352 = vmatprep.subr.mxu0 0.0
    %353 = vmatpush2.msra.mxu0 0.0
    %354 = vmatprep.subr.mxu0 0.0
    %355 = vmatpush2.msra.mxu0 0.0
    %356 = vmatprep.subr.mxu0 0.0
    %357 = vmatpush2.msra.mxu0 0.0
    %358 = vmatprep.subr.mxu0 0.0
    %359 = vmatpush2.msra.mxu0 0.0
    %360 = vmatprep.subr.mxu0 0.0
    %361 = vmatpush2.msra.mxu0 0.0
    %362 = vmatprep.subr.mxu0 0.0
    %363 = vmatpush2.msra.mxu0 0.0
    %364 = vmatprep.subr.mxu0 0.0
    %365 = vmatpush2.msra.mxu0 0.0
    %366 = vmatprep.subr.mxu0 0.0
    %367 = vmatpush2.msra.mxu0 0.0
    %368 = vmatprep.subr.mxu0 0.0
    %369 = vmatpush2.msra.mxu0 0.0
    %370 = vmatprep.subr.mxu0 0.0
    %371 = vmatpush2.msra.mxu0 0.0
    %372 = vmatprep.subr.mxu0 0.0
    %373 = vmatpush2.msra.mxu0 0.0
    %374 = vmatprep.subr.mxu0 0.0
    %375 = vmatpush2.msra.mxu0 0.0
    %376 = vmatprep.subr.mxu0 0.0
    %377 = vmatpush2.msra.mxu0 0.0
    %378 = vmatprep.mubr.f32.mxu0 0.0
    %379 = vmatmul.mubr.f32.gmra.mxu0 %v166
    %v380 = vpop.f32.mrf.mxu0
    %v381 = vadd.f32 0.0, %v380
    %v382 = vpop.f32.mrf.mxu0
    %v383 = vadd.f32 0.0, %v382
    %384 = vdwg.mxu0
    %385 = vmatprep.subr.mxu0 0.0
    %386 = vmatpush1.msra.mxu0 0.0
    %387 = vmatprep.subr.mxu0 0.0
    %388 = vmatpush1.msra.mxu0 0.0
    %389 = vmatprep.subr.mxu0 0.0
    %390 = vmatpush1.msra.mxu0 0.0
    %391 = vmatprep.subr.mxu0 0.0
    %392 = vmatpush1.msra.mxu0 0.0
    %393 = vmatprep.subr.mxu0 0.0
    %394 = vmatpush1.msra.mxu0 0.0
    %395 = vmatprep.subr.mxu0 0.0
    %396 = vmatpush1.msra.mxu0 0.0
    %397 = vmatprep.subr.mxu0 0.0
    %398 = vmatpush1.msra.mxu0 0.0
    %399 = vmatprep.subr.mxu0 0.0
    %400 = vmatpush1.msra.mxu0 0.0
    %401 = vmatprep.subr.mxu0 0.0
    %402 = vmatpush1.msra.mxu0 0.0
    %403 = vmatprep.subr.mxu0 0.0
    %404 = vmatpush1.msra.mxu0 0.0
    %405 = vmatprep.subr.mxu0 0.0
    %406 = vmatpush1.msra.mxu0 0.0
    %407 = vmatprep.subr.mxu0 0.0
    %408 = vmatpush1.msra.mxu0 0.0
    %409 = vmatprep.subr.mxu0 0.0
    %410 = vmatpush1.msra.mxu0 0.0
    %411 = vmatprep.subr.mxu0 0.0
    %412 = vmatpush1.msra.mxu0 0.0
    %413 = vmatprep.subr.mxu0 0.0
    %414 = vmatpush1.msra.mxu0 0.0
    %415 = vmatprep.subr.mxu0 %v313
    %416 = vmatpush1.msra.mxu0 %v312
    %417 = vmatprep.subr.mxu0 0.0
    %418 = vmatpush2.msra.mxu0 0.0
    %419 = vmatprep.subr.mxu0 0.0
    %420 = vmatpush2.msra.mxu0 0.0
    %421 = vmatprep.subr.mxu0 0.0
    %422 = vmatpush2.msra.mxu0 0.0
    %423 = vmatprep.subr.mxu0 0.0
    %424 = vmatpush2.msra.mxu0 0.0
    %425 = vmatprep.subr.mxu0 0.0
    %426 = vmatpush2.msra.mxu0 0.0
    %427 = vmatprep.subr.mxu0 0.0
    %428 = vmatpush2.msra.mxu0 0.0
    %429 = vmatprep.subr.mxu0 0.0
    %430 = vmatpush2.msra.mxu0 0.0
    %431 = vmatprep.subr.mxu0 0.0
    %432 = vmatpush2.msra.mxu0 0.0
    %433 = vmatprep.subr.mxu0 0.0
    %434 = vmatpush2.msra.mxu0 0.0
    %435 = vmatprep.subr.mxu0 0.0
    %436 = vmatpush2.msra.mxu0 0.0
    %437 = vmatprep.subr.mxu0 0.0
    %438 = vmatpush2.msra.mxu0 0.0
    %439 = vmatprep.subr.mxu0 0.0
    %440 = vmatpush2.msra.mxu0 0.0
    %441 = vmatprep.subr.mxu0 0.0
    %442 = vmatpush2.msra.mxu0 0.0
    %443 = vmatprep.subr.mxu0 0.0
    %444 = vmatpush2.msra.mxu0 0.0
    %445 = vmatprep.subr.mxu0 0.0
    %446 = vmatpush2.msra.mxu0 0.0
    %447 = vmatprep.subr.mxu0 0.0
    %448 = vmatpush2.msra.mxu0 0.0
    %449 = vmatprep.mubr.f32.mxu0 0.0
    %450 = vmatmul.mubr.f32.gmra.mxu0 %v166
    %v451 = vpop.f32.mrf.mxu0
    %v452 = vadd.f32 0.0, %v451
    %v453 = vpop.f32.mrf.mxu0
    %v454 = vadd.f32 0.0, %v453
    %455 = vdwg.mxu0
    %v456 = vmul.f32 %v235, 0.125
    %v457 = vmul.f32 %v237, 0.125
    %v458 = vmul.f32 %v306, 0.125
    %v459 = vmul.f32 %v308, 0.125
    %v460 = vmul.f32 %v381, 0.125
    %v461 = vmul.f32 %v383, 0.125
    %v462 = vmul.f32 %v452, 0.125
    %v463 = vmul.f32 %v454, 0.125
    %v464 = vmul.f32 %v456, %v456
    %v465 = vmul.f32 %v457, %v457
    %v466 = vmul.f32 %v458, %v458
    %v467 = vmul.f32 %v459, %v459
    %v468 = vsub.f32 %v460, %v464
    %v469 = vsub.f32 %v461, %v465
    %v470 = vsub.f32 %v462, %v466
    %v471 = vsub.f32 %v463, %v467
    %v472 = vmax.f32 %v468, 0.0
    %v473 = vmax.f32 %v469, 0.0
    %v474 = vmax.f32 %v470, 0.0
    %v475 = vmax.f32 %v471, 0.0
    %v476 = vadd.f32 %v472, 1e-05
    %v477 = vadd.f32 %v473, 1e-05
    %v478 = vadd.f32 %v474, 1e-05
    %v479 = vadd.f32 %v475, 1e-05
    %v480 = vrsqrt.pop %v476
    %v481 = vrsqrt.pop %v477
    %v482 = vrsqrt.pop %v478
    %v483 = vrsqrt.pop %v479
    %v488 = vcombine.low %v480, %v481
    %v489 = vcombine.low %v482, %v483
    %v491 = vunpack.c.l.s4 1966171168
    %v492 = vunpack.c.0.s8 %v491
    %v493 = vlaneseq
    %v494 = vshrl.u32 %v493, 7
    %v495 = vsub.s32 %v492, %v494
    %v496 = vrot.slane %v488, %v495
    %v498 = vunpack.c.l.s4 1966171168
    %v499 = vunpack.c.0.s8 %v498
    %v500 = vlaneseq
    %v501 = vshrl.u32 %v500, 7
    %v502 = vsub.s32 %v499, %v501
    %v503 = vrot.slane %v489, %v502
    %v504 = vcombine.low %v496, %v503
    %v506 = vunpack.c.l.s4 1966171168
    %v507 = vunpack.c.0.s8 %v506
    %v508 = vlaneseq
    %v509 = vshrl.u32 %v508, 7
    %v510 = vsub.s32 %v507, %v509
    %v511 = vrot.slane %v504, %v510
    %v513 = vmul.f32 %v161, %v511
    %v515 = vlaneseq
    %v516 = vshrl.u32 %v515, 7
    %v517 = vsub.s32 0, %v516
    %v518 = vrot.slane %v513, %v517
    %v519 = vlaneseq
    %v520 = vshrl.u32 %v519, 7
    %v521 = vsub.s32 1, %v520
    %v522 = vrot.slane %v513, %v521
    %v523 = vlaneseq
    %v524 = vshrl.u32 %v523, 7
    %v525 = vsub.s32 2, %v524
    %v526 = vrot.slane %v513, %v525
    %v527 = vlaneseq
    %v528 = vshrl.u32 %v527, 7
    %v529 = vsub.s32 3, %v528
    %v530 = vrot.slane %v513, %v529
    %v535 = vmul.f32 %v456, %v518
    %v536 = vmul.f32 %v457, %v522
    %v537 = vmul.f32 %v458, %v526
    %v538 = vmul.f32 %v459, %v530
    %v543 = vcombine.low %v535, %v536
    %v544 = vcombine.low %v537, %v538
    %v546 = vunpack.c.l.s4 1966171168
    %v547 = vunpack.c.0.s8 %v546
    %v548 = vlaneseq
    %v549 = vshrl.u32 %v548, 7
    %v550 = vsub.s32 %v547, %v549
    %v551 = vrot.slane %v543, %v550
    %v553 = vunpack.c.l.s4 1966171168
    %v554 = vunpack.c.0.s8 %v553
    %v555 = vlaneseq
    %v556 = vshrl.u32 %v555, 7
    %v557 = vsub.s32 %v554, %v556
    %v558 = vrot.slane %v544, %v557
    %v559 = vcombine.low %v551, %v558
    %v561 = vunpack.c.l.s4 1966171168
    %v562 = vunpack.c.0.s8 %v561
    %v563 = vlaneseq
    %v564 = vshrl.u32 %v563, 7
    %v565 = vsub.s32 %v562, %v564
    %v566 = vrot.slane %v559, %v565
    %v568 = vsub.f32 %v163, %v566
    %v569 = vmul.f32 %v114, %v518
    %v570 = vmul.f32 %v116, %v522
    %v571 = vmul.f32 %v155, %v526
    %v572 = vmul.f32 %v157, %v530
    %v574 = vlaneseq
    %v575 = vshrl.u32 %v574, 7
    %v576 = vsub.s32 0, %v575
    %v577 = vrot.slane %v568, %v576
    %v578 = vlaneseq
    %v579 = vshrl.u32 %v578, 7
    %v580 = vsub.s32 1, %v579
    %v581 = vrot.slane %v568, %v580
    %v582 = vlaneseq
    %v583 = vshrl.u32 %v582, 7
    %v584 = vsub.s32 2, %v583
    %v585 = vrot.slane %v568, %v584
    %v586 = vlaneseq
    %v587 = vshrl.u32 %v586, 7
    %v588 = vsub.s32 3, %v587
    %v589 = vrot.slane %v568, %v588
    %v594 = vadd.f32 %v569, %v577
    %v595 = vadd.f32 %v570, %v581
    %v596 = vadd.f32 %v571, %v585
    %v597 = vadd.f32 %v572, %v589
    %v598 = vmax.f32 %v594, 0.0
    %v599 = vmax.f32 %v595, 0.0
    %v600 = vmax.f32 %v596, 0.0
    %v601 = vmax.f32 %v597, 0.0
    %v602 = vpack.c.bf16 %v598, %v598
    %v603 = vpack.c.bf16 %v599, %v599
    %v604 = vpack.c.bf16 %v600, %v600
    %v605 = vpack.c.bf16 %v601, %v601
    %v606 = vld [vmem:[%s2] sm:$0xf]
    %v607 = vld [vmem:[%s2 + $0x4] sm:$0xf]
    %v608 = vld [vmem:[%s2 + $0x8] sm:$0xf]
    %v609 = vld [vmem:[%s2 + $0xc] sm:$0xf]
    %v610 = vld [vmem:[%s2 + $0x10] sm:$0xf]
    %v611 = vld [vmem:[%s2 + $0x14] sm:$0xf]
    %v612 = vld [vmem:[%s2 + $0x18] sm:$0xf]
    %v613 = vld [vmem:[%s2 + $0x1c] sm:$0xf]
    %v614 = vld [vmem:[%s2 + $0x20] sm:$0xf]
    %v615 = vld [vmem:[%s2 + $0x24] sm:$0xf]
    %v616 = vld [vmem:[%s2 + $0x28] sm:$0xf]
    %v617 = vld [vmem:[%s2 + $0x2c] sm:$0xf]
    %v618 = vld [vmem:[%s2 + $0x30] sm:$0xf]
    %v619 = vld [vmem:[%s2 + $0x34] sm:$0xf]
    %v620 = vld [vmem:[%s2 + $0x38] sm:$0xf]
    %v621 = vld [vmem:[%s2 + $0x3c] sm:$0xf]
    %v622 = vld [vmem:[%s2 + $0x40] sm:$0xf]
    %v623 = vld [vmem:[%s2 + $0x44] sm:$0xf]
    %v624 = vld [vmem:[%s2 + $0x48] sm:$0xf]
    %v625 = vld [vmem:[%s2 + $0x4c] sm:$0xf]
    %v626 = vld [vmem:[%s2 + $0x50] sm:$0xf]
    %v627 = vld [vmem:[%s2 + $0x54] sm:$0xf]
    %v628 = vld [vmem:[%s2 + $0x58] sm:$0xf]
    %v629 = vld [vmem:[%s2 + $0x5c] sm:$0xf]
    %v630 = vld [vmem:[%s2 + $0x60] sm:$0xf]
    %v631 = vld [vmem:[%s2 + $0x64] sm:$0xf]
    %v632 = vld [vmem:[%s2 + $0x68] sm:$0xf]
    %v633 = vld [vmem:[%s2 + $0x6c] sm:$0xf]
    %v634 = vld [vmem:[%s2 + $0x70] sm:$0xf]
    %v635 = vld [vmem:[%s2 + $0x74] sm:$0xf]
    %v636 = vld [vmem:[%s2 + $0x78] sm:$0xf]
    %v637 = vld [vmem:[%s2 + $0x7c] sm:$0xf]
    %v638 = vld [vmem:[%s2 + $0x80] sm:$0xf]
    %v639 = vld [vmem:[%s2 + $0x84] sm:$0xf]
    %v640 = vld [vmem:[%s2 + $0x88] sm:$0xf]
    %v641 = vld [vmem:[%s2 + $0x8c] sm:$0xf]
    %v642 = vld [vmem:[%s2 + $0x90] sm:$0xf]
    %v643 = vld [vmem:[%s2 + $0x94] sm:$0xf]
    %v644 = vld [vmem:[%s2 + $0x98] sm:$0xf]
    %v645 = vld [vmem:[%s2 + $0x9c] sm:$0xf]
    %v646 = vld [vmem:[%s2 + $0xa0] sm:$0xf]
    %v647 = vld [vmem:[%s2 + $0xa4] sm:$0xf]
    %v648 = vld [vmem:[%s2 + $0xa8] sm:$0xf]
    %v649 = vld [vmem:[%s2 + $0xac] sm:$0xf]
    %v650 = vld [vmem:[%s2 + $0xb0] sm:$0xf]
    %v651 = vld [vmem:[%s2 + $0xb4] sm:$0xf]
    %v652 = vld [vmem:[%s2 + $0xb8] sm:$0xf]
    %v653 = vld [vmem:[%s2 + $0xbc] sm:$0xf]
    %v654 = vld [vmem:[%s2 + $0xc0] sm:$0xf]
    %v655 = vld [vmem:[%s2 + $0xc4] sm:$0xf]
    %v656 = vld [vmem:[%s2 + $0xc8] sm:$0xf]
    %v657 = vld [vmem:[%s2 + $0xcc] sm:$0xf]
    %v658 = vld [vmem:[%s2 + $0xd0] sm:$0xf]
    %v659 = vld [vmem:[%s2 + $0xd4] sm:$0xf]
    %v660 = vld [vmem:[%s2 + $0xd8] sm:$0xf]
    %v661 = vld [vmem:[%s2 + $0xdc] sm:$0xf]
    %v662 = vld [vmem:[%s2 + $0xe0] sm:$0xf]
    %v663 = vld [vmem:[%s2 + $0xe4] sm:$0xf]
    %v664 = vld [vmem:[%s2 + $0xe8] sm:$0xf]
    %v665 = vld [vmem:[%s2 + $0xec] sm:$0xf]
    %v666 = vld [vmem:[%s2 + $0xf0] sm:$0xf]
    %v667 = vld [vmem:[%s2 + $0xf4] sm:$0xf]
    %v668 = vld [vmem:[%s2 + $0xf8] sm:$0xf]
    %v669 = vld [vmem:[%s2 + $0xfc] sm:$0xf]
    %v734 = vunpack.c.l.b16 %v606
    %v735 = vunpack.c.l.b16 %v607
    %v736 = vunpack.c.l.b16 %v608
    %v737 = vunpack.c.l.b16 %v609
    %v738 = vunpack.c.l.b16 %v610
    %v739 = vunpack.c.l.b16 %v611
    %v740 = vunpack.c.l.b16 %v612
    %v741 = vunpack.c.l.b16 %v613
    %v742 = vunpack.c.l.b16 %v614
    %v743 = vunpack.c.l.b16 %v615
    %v744 = vunpack.c.l.b16 %v616
    %v745 = vunpack.c.l.b16 %v617
    %v746 = vunpack.c.l.b16 %v618
    %v747 = vunpack.c.l.b16 %v619
    %v748 = vunpack.c.l.b16 %v620
    %v749 = vunpack.c.l.b16 %v621
    %v750 = vunpack.c.l.b16 %v622
    %v751 = vunpack.c.l.b16 %v623
    %v752 = vunpack.c.l.b16 %v624
    %v753 = vunpack.c.l.b16 %v625
    %v754 = vunpack.c.l.b16 %v626
    %v755 = vunpack.c.l.b16 %v627
    %v756 = vunpack.c.l.b16 %v628
    %v757 = vunpack.c.l.b16 %v629
    %v758 = vunpack.c.l.b16 %v630
    %v759 = vunpack.c.l.b16 %v631
    %v760 = vunpack.c.l.b16 %v632
    %v761 = vunpack.c.l.b16 %v633
    %v762 = vunpack.c.l.b16 %v634
    %v763 = vunpack.c.l.b16 %v635
    %v764 = vunpack.c.l.b16 %v636
    %v765 = vunpack.c.l.b16 %v637
    %v766 = vunpack.c.l.b16 %v638
    %v767 = vunpack.c.l.b16 %v639
    %v768 = vunpack.c.l.b16 %v640
    %v769 = vunpack.c.l.b16 %v641
    %v770 = vunpack.c.l.b16 %v642
    %v771 = vunpack.c.l.b16 %v643
    %v772 = vunpack.c.l.b16 %v644
    %v773 = vunpack.c.l.b16 %v645
    %v774 = vunpack.c.l.b16 %v646
    %v775 = vunpack.c.l.b16 %v647
    %v776 = vunpack.c.l.b16 %v648
    %v777 = vunpack.c.l.b16 %v649
    %v778 = vunpack.c.l.b16 %v650
    %v779 = vunpack.c.l.b16 %v651
    %v780 = vunpack.c.l.b16 %v652
    %v781 = vunpack.c.l.b16 %v653
    %v782 = vunpack.c.l.b16 %v654
    %v783 = vunpack.c.l.b16 %v655
    %v784 = vunpack.c.l.b16 %v656
    %v785 = vunpack.c.l.b16 %v657
    %v786 = vunpack.c.l.b16 %v658
    %v787 = vunpack.c.l.b16 %v659
    %v788 = vunpack.c.l.b16 %v660
    %v789 = vunpack.c.l.b16 %v661
    %v790 = vunpack.c.l.b16 %v662
    %v791 = vunpack.c.l.b16 %v663
    %v792 = vunpack.c.l.b16 %v664
    %v793 = vunpack.c.l.b16 %v665
    %v794 = vunpack.c.l.b16 %v666
    %v795 = vunpack.c.l.b16 %v667
    %v796 = vunpack.c.l.b16 %v668
    %v797 = vunpack.c.l.b16 %v669
    %v798 = vpack.c.b16 %v735, %v734
    %v799 = vpack.c.b16 %v737, %v736
    %v800 = vpack.c.b16 %v739, %v738
    %v801 = vpack.c.b16 %v741, %v740
    %v802 = vpack.c.b16 %v743, %v742
    %v803 = vpack.c.b16 %v745, %v744
    %v804 = vpack.c.b16 %v747, %v746
    %v805 = vpack.c.b16 %v749, %v748
    %v806 = vpack.c.b16 %v751, %v750
    %v807 = vpack.c.b16 %v753, %v752
    %v808 = vpack.c.b16 %v755, %v754
    %v809 = vpack.c.b16 %v757, %v756
    %v810 = vpack.c.b16 %v759, %v758
    %v811 = vpack.c.b16 %v761, %v760
    %v812 = vpack.c.b16 %v763, %v762
    %v813 = vpack.c.b16 %v765, %v764
    %v814 = vpack.c.b16 %v767, %v766
    %v815 = vpack.c.b16 %v769, %v768
    %v816 = vpack.c.b16 %v771, %v770
    %v817 = vpack.c.b16 %v773, %v772
    %v818 = vpack.c.b16 %v775, %v774
    %v819 = vpack.c.b16 %v777, %v776
    %v820 = vpack.c.b16 %v779, %v778
    %v821 = vpack.c.b16 %v781, %v780
    %v822 = vpack.c.b16 %v783, %v782
    %v823 = vpack.c.b16 %v785, %v784
    %v824 = vpack.c.b16 %v787, %v786
    %v825 = vpack.c.b16 %v789, %v788
    %v826 = vpack.c.b16 %v791, %v790
    %v827 = vpack.c.b16 %v793, %v792
    %v828 = vpack.c.b16 %v795, %v794
    %v829 = vpack.c.b16 %v797, %v796
    %862 = vmatprep.subr.bf16.mxu0 0
    %863 = vmatpush1.bf16.msra.mxu0 %v805
    %864 = vmatprep.subr.bf16.mxu0 0
    %865 = vmatpush1.bf16.msra.mxu0 %v804
    %866 = vmatprep.subr.bf16.mxu0 0
    %867 = vmatpush1.bf16.msra.mxu0 %v803
    %868 = vmatprep.subr.bf16.mxu0 0
    %869 = vmatpush1.bf16.msra.mxu0 %v802
    %870 = vmatprep.subr.bf16.mxu0 0
    %871 = vmatpush1.bf16.msra.mxu0 %v801
    %872 = vmatprep.subr.bf16.mxu0 0
    %873 = vmatpush1.bf16.msra.mxu0 %v800
    %874 = vmatprep.subr.bf16.mxu0 0
    %875 = vmatpush1.bf16.msra.mxu0 %v799
    %876 = vmatprep.subr.bf16.mxu0 0
    %877 = vmatpush1.bf16.msra.mxu0 %v798
    %878 = vmatprep.subr.bf16.mxu0 0
    %879 = vmatpush2.bf16.msra.mxu0 %v813
    %880 = vmatprep.subr.bf16.mxu0 0
    %881 = vmatpush2.bf16.msra.mxu0 %v812
    %882 = vmatprep.subr.bf16.mxu0 0
    %883 = vmatpush2.bf16.msra.mxu0 %v811
    %884 = vmatprep.subr.bf16.mxu0 0
    %885 = vmatpush2.bf16.msra.mxu0 %v810
    %886 = vmatprep.subr.bf16.mxu0 0
    %887 = vmatpush2.bf16.msra.mxu0 %v809
    %888 = vmatprep.subr.bf16.mxu0 0
    %889 = vmatpush2.bf16.msra.mxu0 %v808
    %890 = vmatprep.subr.bf16.mxu0 0
    %891 = vmatpush2.bf16.msra.mxu0 %v807
    %892 = vmatprep.subr.bf16.mxu0 0
    %893 = vmatpush2.bf16.msra.mxu0 %v806
    %894 = vmatprep.mubr.bf16.mxu0 %v603
    %895 = vmatmul.mubr.bf16.gmra.mxu0 %v602
    %v896 = vpop.f32.mrf.mxu0
    %v897 = vadd.f32 0.0, %v896
    %v898 = vpop.f32.mrf.mxu0
    %v899 = vpop.f32.mrf.mxu0
    %v900 = vpop.f32.mrf.mxu0
    %901 = vdwg.mxu0
    %902 = vmatprep.subr.bf16.mxu0 0
    %903 = vmatpush1.bf16.msra.mxu0 %v821
    %904 = vmatprep.subr.bf16.mxu0 0
    %905 = vmatpush1.bf16.msra.mxu0 %v820
    %906 = vmatprep.subr.bf16.mxu0 0
    %907 = vmatpush1.bf16.msra.mxu0 %v819
    %908 = vmatprep.subr.bf16.mxu0 0
    %909 = vmatpush1.bf16.msra.mxu0 %v818
    %910 = vmatprep.subr.bf16.mxu0 0
    %911 = vmatpush1.bf16.msra.mxu0 %v817
    %912 = vmatprep.subr.bf16.mxu0 0
    %913 = vmatpush1.bf16.msra.mxu0 %v816
    %914 = vmatprep.subr.bf16.mxu0 0
    %915 = vmatpush1.bf16.msra.mxu0 %v815
    %916 = vmatprep.subr.bf16.mxu0 0
    %917 = vmatpush1.bf16.msra.mxu0 %v814
    %918 = vmatprep.subr.bf16.mxu0 0
    %919 = vmatpush2.bf16.msra.mxu0 %v829
    %920 = vmatprep.subr.bf16.mxu0 0
    %921 = vmatpush2.bf16.msra.mxu0 %v828
    %922 = vmatprep.subr.bf16.mxu0 0
    %923 = vmatpush2.bf16.msra.mxu0 %v827
    %924 = vmatprep.subr.bf16.mxu0 0
    %925 = vmatpush2.bf16.msra.mxu0 %v826
    %926 = vmatprep.subr.bf16.mxu0 0
    %927 = vmatpush2.bf16.msra.mxu0 %v825
    %928 = vmatprep.subr.bf16.mxu0 0
    %929 = vmatpush2.bf16.msra.mxu0 %v824
    %930 = vmatprep.subr.bf16.mxu0 0
    %931 = vmatpush2.bf16.msra.mxu0 %v823
    %932 = vmatprep.subr.bf16.mxu0 0
    %933 = vmatpush2.bf16.msra.mxu0 %v822
    %934 = vmatprep.mubr.bf16.mxu0 %v605
    %935 = vmatmul.mubr.bf16.gmra.mxu0 %v604
    %v936 = vpop.f32.mrf.mxu0
    %v937 = vadd.f32 %v897, %v936
    %v938 = vpop.f32.mrf.mxu0
    %v939 = vpop.f32.mrf.mxu0
    %v940 = vpop.f32.mrf.mxu0
    %941 = vdwg.mxu0
    %v942 = vld [vmem:[%s5 + $0x2] ss:$0 sm:$0xff]
    %v943 = vld [vmem:[%s5 + $0x3] ss:$0 sm:$0xff]
    %944 = vmatprep.subr.mxu0 0.0
    %945 = vmatpush1.msra.mxu0 0.0
    %946 = vmatprep.subr.mxu0 0.0
    %947 = vmatpush1.msra.mxu0 0.0
    %948 = vmatprep.subr.mxu0 0.0
    %949 = vmatpush1.msra.mxu0 0.0
    %950 = vmatprep.subr.mxu0 0.0
    %951 = vmatpush1.msra.mxu0 0.0
    %952 = vmatprep.subr.mxu0 0.0
    %953 = vmatpush1.msra.mxu0 0.0
    %954 = vmatprep.subr.mxu0 0.0
    %955 = vmatpush1.msra.mxu0 0.0
    %956 = vmatprep.subr.mxu0 0.0
    %957 = vmatpush1.msra.mxu0 0.0
    %958 = vmatprep.subr.mxu0 0.0
    %959 = vmatpush1.msra.mxu0 0.0
    %960 = vmatprep.subr.mxu0 0.0
    %961 = vmatpush1.msra.mxu0 0.0
    %962 = vmatprep.subr.mxu0 0.0
    %963 = vmatpush1.msra.mxu0 0.0
    %964 = vmatprep.subr.mxu0 0.0
    %965 = vmatpush1.msra.mxu0 0.0
    %966 = vmatprep.subr.mxu0 0.0
    %967 = vmatpush1.msra.mxu0 0.0
    %968 = vmatprep.subr.mxu0 0.0
    %969 = vmatpush1.msra.mxu0 0.0
    %970 = vmatprep.subr.mxu0 0.0
    %971 = vmatpush1.msra.mxu0 0.0
    %972 = vmatprep.subr.mxu0 0.0
    %973 = vmatpush1.msra.mxu0 0.0
    %974 = vmatprep.subr.mxu0 0.0
    %975 = vmatpush1.msra.mxu0 %v937
    %976 = vmatprep.subr.mxu0 0.0
    %977 = vmatpush2.msra.mxu0 0.0
    %978 = vmatprep.subr.mxu0 0.0
    %979 = vmatpush2.msra.mxu0 0.0
    %980 = vmatprep.subr.mxu0 0.0
    %981 = vmatpush2.msra.mxu0 0.0
    %982 = vmatprep.subr.mxu0 0.0
    %983 = vmatpush2.msra.mxu0 0.0
    %984 = vmatprep.subr.mxu0 0.0
    %985 = vmatpush2.msra.mxu0 0.0
    %986 = vmatprep.subr.mxu0 0.0
    %987 = vmatpush2.msra.mxu0 0.0
    %988 = vmatprep.subr.mxu0 0.0
    %989 = vmatpush2.msra.mxu0 0.0
    %990 = vmatprep.subr.mxu0 0.0
    %991 = vmatpush2.msra.mxu0 0.0
    %992 = vmatprep.subr.mxu0 0.0
    %993 = vmatpush2.msra.mxu0 0.0
    %994 = vmatprep.subr.mxu0 0.0
    %995 = vmatpush2.msra.mxu0 0.0
    %996 = vmatprep.subr.mxu0 0.0
    %997 = vmatpush2.msra.mxu0 0.0
    %998 = vmatprep.subr.mxu0 0.0
    %999 = vmatpush2.msra.mxu0 0.0
    %1000 = vmatprep.subr.mxu0 0.0
    %1001 = vmatpush2.msra.mxu0 0.0
    %1002 = vmatprep.subr.mxu0 0.0
    %1003 = vmatpush2.msra.mxu0 0.0
    %1004 = vmatprep.subr.mxu0 0.0
    %1005 = vmatpush2.msra.mxu0 0.0
    %1006 = vmatprep.subr.mxu0 0.0
    %1007 = vmatpush2.msra.mxu0 0.0
    %1008 = vmatprep.mubr.f32.mxu0 0.0
    %1009 = vmatmul.mubr.f32.gmra.mxu0 %v166
    %v1010 = vpop.f32.mrf.mxu0
    %v1011 = vadd.f32 0.0, %v1010
    %v1012 = vpop.f32.mrf.mxu0
    %1013 = vdwg.mxu0
    %v1014 = vmul.f32 %v937, %v937
    %1015 = vmatprep.subr.mxu0 0.0
    %1016 = vmatpush1.msra.mxu0 0.0
    %1017 = vmatprep.subr.mxu0 0.0
    %1018 = vmatpush1.msra.mxu0 0.0
    %1019 = vmatprep.subr.mxu0 0.0
    %1020 = vmatpush1.msra.mxu0 0.0
    %1021 = vmatprep.subr.mxu0 0.0
    %1022 = vmatpush1.msra.mxu0 0.0
    %1023 = vmatprep.subr.mxu0 0.0
    %1024 = vmatpush1.msra.mxu0 0.0
    %1025 = vmatprep.subr.mxu0 0.0
    %1026 = vmatpush1.msra.mxu0 0.0
    %1027 = vmatprep.subr.mxu0 0.0
    %1028 = vmatpush1.msra.mxu0 0.0
    %1029 = vmatprep.subr.mxu0 0.0
    %1030 = vmatpush1.msra.mxu0 0.0
    %1031 = vmatprep.subr.mxu0 0.0
    %1032 = vmatpush1.msra.mxu0 0.0
    %1033 = vmatprep.subr.mxu0 0.0
    %1034 = vmatpush1.msra.mxu0 0.0
    %1035 = vmatprep.subr.mxu0 0.0
    %1036 = vmatpush1.msra.mxu0 0.0
    %1037 = vmatprep.subr.mxu0 0.0
    %1038 = vmatpush1.msra.mxu0 0.0
    %1039 = vmatprep.subr.mxu0 0.0
    %1040 = vmatpush1.msra.mxu0 0.0
    %1041 = vmatprep.subr.mxu0 0.0
    %1042 = vmatpush1.msra.mxu0 0.0
    %1043 = vmatprep.subr.mxu0 0.0
    %1044 = vmatpush1.msra.mxu0 0.0
    %1045 = vmatprep.subr.mxu0 0.0
    %1046 = vmatpush1.msra.mxu0 %v1014
    %1047 = vmatprep.subr.mxu0 0.0
    %1048 = vmatpush2.msra.mxu0 0.0
    %1049 = vmatprep.subr.mxu0 0.0
    %1050 = vmatpush2.msra.mxu0 0.0
    %1051 = vmatprep.subr.mxu0 0.0
    %1052 = vmatpush2.msra.mxu0 0.0
    %1053 = vmatprep.subr.mxu0 0.0
    %1054 = vmatpush2.msra.mxu0 0.0
    %1055 = vmatprep.subr.mxu0 0.0
    %1056 = vmatpush2.msra.mxu0 0.0
    %1057 = vmatprep.subr.mxu0 0.0
    %1058 = vmatpush2.msra.mxu0 0.0
    %1059 = vmatprep.subr.mxu0 0.0
    %1060 = vmatpush2.msra.mxu0 0.0
    %1061 = vmatprep.subr.mxu0 0.0
    %1062 = vmatpush2.msra.mxu0 0.0
    %1063 = vmatprep.subr.mxu0 0.0
    %1064 = vmatpush2.msra.mxu0 0.0
    %1065 = vmatprep.subr.mxu0 0.0
    %1066 = vmatpush2.msra.mxu0 0.0
    %1067 = vmatprep.subr.mxu0 0.0
    %1068 = vmatpush2.msra.mxu0 0.0
    %1069 = vmatprep.subr.mxu0 0.0
    %1070 = vmatpush2.msra.mxu0 0.0
    %1071 = vmatprep.subr.mxu0 0.0
    %1072 = vmatpush2.msra.mxu0 0.0
    %1073 = vmatprep.subr.mxu0 0.0
    %1074 = vmatpush2.msra.mxu0 0.0
    %1075 = vmatprep.subr.mxu0 0.0
    %1076 = vmatpush2.msra.mxu0 0.0
    %1077 = vmatprep.subr.mxu0 0.0
    %1078 = vmatpush2.msra.mxu0 0.0
    %1079 = vmatprep.mubr.f32.mxu0 0.0
    %1080 = vmatmul.mubr.f32.gmra.mxu0 %v166
    %v1081 = vpop.f32.mrf.mxu0
    %v1082 = vadd.f32 0.0, %v1081
    %v1083 = vpop.f32.mrf.mxu0
    %1084 = vdwg.mxu0
    %v1085 = vmul.f32 %v1011, 0.125
    %v1086 = vmul.f32 %v1082, 0.125
    %v1087 = vmul.f32 %v1085, %v1085
    %v1088 = vsub.f32 %v1086, %v1087
    %v1089 = vmax.f32 %v1088, 0.0
    %v1090 = vadd.f32 %v1089, 1e-05
    %v1091 = vrsqrt.pop %v1090
    %v1092 = vmul.f32 %v942, %v1091
    %v1093 = vmul.f32 %v1085, %v1092
    %v1094 = vsub.f32 %v943, %v1093
    %v1095 = vlaneseq
    %v1096 = vshrl.u32 %v1095, 7
    %v1097 = vsub.s32 0, %v1096
    %v1098 = vrot.slane %v1092, %v1097
    %v1099 = vmul.f32 %v937, %v1098
    %v1100 = vlaneseq
    %v1101 = vshrl.u32 %v1100, 7
    %v1102 = vsub.s32 0, %v1101
    %v1103 = vrot.slane %v1094, %v1102
    %v1104 = vadd.f32 %v1099, %v1103
    %v1105 = vmax.f32 %v1104, 0.0
    %v1106 = vpack.c.bf16 %v1105, %v1105
    %v1107 = vld [vmem:[%s3] sm:$0xf]
    %v1108 = vld [vmem:[%s3 + $0x4] sm:$0xf]
    %v1109 = vld [vmem:[%s3 + $0x8] sm:$0xf]
    %v1110 = vld [vmem:[%s3 + $0xc] sm:$0xf]
    %v1111 = vld [vmem:[%s3 + $0x10] sm:$0xf]
    %v1112 = vld [vmem:[%s3 + $0x14] sm:$0xf]
    %v1113 = vld [vmem:[%s3 + $0x18] sm:$0xf]
    %v1114 = vld [vmem:[%s3 + $0x1c] sm:$0xf]
    %v1115 = vld [vmem:[%s3 + $0x20] sm:$0xf]
    %v1116 = vld [vmem:[%s3 + $0x24] sm:$0xf]
    %v1117 = vld [vmem:[%s3 + $0x28] sm:$0xf]
    %v1118 = vld [vmem:[%s3 + $0x2c] sm:$0xf]
    %v1119 = vld [vmem:[%s3 + $0x30] sm:$0xf]
    %v1120 = vld [vmem:[%s3 + $0x34] sm:$0xf]
    %v1121 = vld [vmem:[%s3 + $0x38] sm:$0xf]
    %v1122 = vld [vmem:[%s3 + $0x3c] sm:$0xf]
    %v1139 = vunpack.c.l.b16 %v1107
    %v1140 = vunpack.c.l.b16 %v1108
    %v1141 = vunpack.c.l.b16 %v1109
    %v1142 = vunpack.c.l.b16 %v1110
    %v1143 = vunpack.c.l.b16 %v1111
    %v1144 = vunpack.c.l.b16 %v1112
    %v1145 = vunpack.c.l.b16 %v1113
    %v1146 = vunpack.c.l.b16 %v1114
    %v1147 = vunpack.c.l.b16 %v1115
    %v1148 = vunpack.c.l.b16 %v1116
    %v1149 = vunpack.c.l.b16 %v1117
    %v1150 = vunpack.c.l.b16 %v1118
    %v1151 = vunpack.c.l.b16 %v1119
    %v1152 = vunpack.c.l.b16 %v1120
    %v1153 = vunpack.c.l.b16 %v1121
    %v1154 = vunpack.c.l.b16 %v1122
    %v1155 = vpack.c.b16 %v1140, %v1139
    %v1156 = vpack.c.b16 %v1142, %v1141
    %v1157 = vpack.c.b16 %v1144, %v1143
    %v1158 = vpack.c.b16 %v1146, %v1145
    %v1159 = vpack.c.b16 %v1148, %v1147
    %v1160 = vpack.c.b16 %v1150, %v1149
    %v1161 = vpack.c.b16 %v1152, %v1151
    %v1162 = vpack.c.b16 %v1154, %v1153
    %1171 = vmatprep.subr.bf16.mxu0 0
    %1172 = vmatpush1.bf16.msra.mxu0 %v1162
    %1173 = vmatprep.subr.bf16.mxu0 0
    %1174 = vmatpush1.bf16.msra.mxu0 %v1161
    %1175 = vmatprep.subr.bf16.mxu0 0
    %1176 = vmatpush1.bf16.msra.mxu0 %v1160
    %1177 = vmatprep.subr.bf16.mxu0 0
    %1178 = vmatpush1.bf16.msra.mxu0 %v1159
    %1179 = vmatprep.subr.bf16.mxu0 0
    %1180 = vmatpush1.bf16.msra.mxu0 %v1158
    %1181 = vmatprep.subr.bf16.mxu0 0
    %1182 = vmatpush1.bf16.msra.mxu0 %v1157
    %1183 = vmatprep.subr.bf16.mxu0 0
    %1184 = vmatpush1.bf16.msra.mxu0 %v1156
    %1185 = vmatprep.subr.bf16.mxu0 0
    %1186 = vmatpush1.bf16.msra.mxu0 %v1155
    %1187 = vmatprep.subr.bf16.mxu0 0
    %1188 = vmatpush2.bf16.msra.mxu0 0
    %1189 = vmatprep.subr.bf16.mxu0 0
    %1190 = vmatpush2.bf16.msra.mxu0 0
    %1191 = vmatprep.subr.bf16.mxu0 0
    %1192 = vmatpush2.bf16.msra.mxu0 0
    %1193 = vmatprep.subr.bf16.mxu0 0
    %1194 = vmatpush2.bf16.msra.mxu0 0
    %1195 = vmatprep.subr.bf16.mxu0 0
    %1196 = vmatpush2.bf16.msra.mxu0 0
    %1197 = vmatprep.subr.bf16.mxu0 0
    %1198 = vmatpush2.bf16.msra.mxu0 0
    %1199 = vmatprep.subr.bf16.mxu0 0
    %1200 = vmatpush2.bf16.msra.mxu0 0
    %1201 = vmatprep.subr.bf16.mxu0 0
    %1202 = vmatpush2.bf16.msra.mxu0 0
    %1203 = vmatprep.mubr.bf16.mxu0 0
    %1204 = vmatmul.mubr.bf16.gmra.mxu0 %v1106
    %v1205 = vpop.f32.mrf.mxu0
    %v1206 = vadd.f32 0.0, %v1205
    %v1207 = vpop.f32.mrf.mxu0
    %v1208 = vpop.f32.mrf.mxu0
    %v1209 = vpop.f32.mrf.mxu0
    %1210 = vdwg.mxu0
    %v1211 = vld [vmem:[%s5 + $0x4] ss:$0 sm:$0xff]
    %v1212 = vld [vmem:[%s5 + $0x5] ss:$0 sm:$0xff]
    %1213 = vmatprep.subr.mxu0 0.0
    %1214 = vmatpush1.msra.mxu0 0.0
    %1215 = vmatprep.subr.mxu0 0.0
    %1216 = vmatpush1.msra.mxu0 0.0
    %1217 = vmatprep.subr.mxu0 0.0
    %1218 = vmatpush1.msra.mxu0 0.0
    %1219 = vmatprep.subr.mxu0 0.0
    %1220 = vmatpush1.msra.mxu0 0.0
    %1221 = vmatprep.subr.mxu0 0.0
    %1222 = vmatpush1.msra.mxu0 0.0
    %1223 = vmatprep.subr.mxu0 0.0
    %1224 = vmatpush1.msra.mxu0 0.0
    %1225 = vmatprep.subr.mxu0 0.0
    %1226 = vmatpush1.msra.mxu0 0.0
    %1227 = vmatprep.subr.mxu0 0.0
    %1228 = vmatpush1.msra.mxu0 0.0
    %1229 = vmatprep.subr.mxu0 0.0
    %1230 = vmatpush1.msra.mxu0 0.0
    %1231 = vmatprep.subr.mxu0 0.0
    %1232 = vmatpush1.msra.mxu0 0.0
    %1233 = vmatprep.subr.mxu0 0.0
    %1234 = vmatpush1.msra.mxu0 0.0
    %1235 = vmatprep.subr.mxu0 0.0
    %1236 = vmatpush1.msra.mxu0 0.0
    %1237 = vmatprep.subr.mxu0 0.0
    %1238 = vmatpush1.msra.mxu0 0.0
    %1239 = vmatprep.subr.mxu0 0.0
    %1240 = vmatpush1.msra.mxu0 0.0
    %1241 = vmatprep.subr.mxu0 0.0
    %1242 = vmatpush1.msra.mxu0 0.0
    %1243 = vmatprep.subr.mxu0 0.0
    %1244 = vmatpush1.msra.mxu0 %v1206
    %1245 = vmatprep.subr.mxu0 0.0
    %1246 = vmatpush2.msra.mxu0 0.0
    %1247 = vmatprep.subr.mxu0 0.0
    %1248 = vmatpush2.msra.mxu0 0.0
    %1249 = vmatprep.subr.mxu0 0.0
    %1250 = vmatpush2.msra.mxu0 0.0
    %1251 = vmatprep.subr.mxu0 0.0
    %1252 = vmatpush2.msra.mxu0 0.0
    %1253 = vmatprep.subr.mxu0 0.0
    %1254 = vmatpush2.msra.mxu0 0.0
    %1255 = vmatprep.subr.mxu0 0.0
    %1256 = vmatpush2.msra.mxu0 0.0
    %1257 = vmatprep.subr.mxu0 0.0
    %1258 = vmatpush2.msra.mxu0 0.0
    %1259 = vmatprep.subr.mxu0 0.0
    %1260 = vmatpush2.msra.mxu0 0.0
    %1261 = vmatprep.subr.mxu0 0.0
    %1262 = vmatpush2.msra.mxu0 0.0
    %1263 = vmatprep.subr.mxu0 0.0
    %1264 = vmatpush2.msra.mxu0 0.0
    %1265 = vmatprep.subr.mxu0 0.0
    %1266 = vmatpush2.msra.mxu0 0.0
    %1267 = vmatprep.subr.mxu0 0.0
    %1268 = vmatpush2.msra.mxu0 0.0
    %1269 = vmatprep.subr.mxu0 0.0
    %1270 = vmatpush2.msra.mxu0 0.0
    %1271 = vmatprep.subr.mxu0 0.0
    %1272 = vmatpush2.msra.mxu0 0.0
    %1273 = vmatprep.subr.mxu0 0.0
    %1274 = vmatpush2.msra.mxu0 0.0
    %1275 = vmatprep.subr.mxu0 0.0
    %1276 = vmatpush2.msra.mxu0 0.0
    %1277 = vmatprep.mubr.f32.mxu0 0.0
    %1278 = vmatmul.mubr.f32.gmra.mxu0 %v166
    %v1279 = vpop.f32.mrf.mxu0
    %v1280 = vadd.f32 0.0, %v1279
    %v1281 = vpop.f32.mrf.mxu0
    %1282 = vdwg.mxu0
    %v1283 = vmul.f32 %v1206, %v1206
    %1284 = vmatprep.subr.mxu0 0.0
    %1285 = vmatpush1.msra.mxu0 0.0
    %1286 = vmatprep.subr.mxu0 0.0
    %1287 = vmatpush1.msra.mxu0 0.0
    %1288 = vmatprep.subr.mxu0 0.0
    %1289 = vmatpush1.msra.mxu0 0.0
    %1290 = vmatprep.subr.mxu0 0.0
    %1291 = vmatpush1.msra.mxu0 0.0
    %1292 = vmatprep.subr.mxu0 0.0
    %1293 = vmatpush1.msra.mxu0 0.0
    %1294 = vmatprep.subr.mxu0 0.0
    %1295 = vmatpush1.msra.mxu0 0.0
    %1296 = vmatprep.subr.mxu0 0.0
    %1297 = vmatpush1.msra.mxu0 0.0
    %1298 = vmatprep.subr.mxu0 0.0
    %1299 = vmatpush1.msra.mxu0 0.0
    %1300 = vmatprep.subr.mxu0 0.0
    %1301 = vmatpush1.msra.mxu0 0.0
    %1302 = vmatprep.subr.mxu0 0.0
    %1303 = vmatpush1.msra.mxu0 0.0
    %1304 = vmatprep.subr.mxu0 0.0
    %1305 = vmatpush1.msra.mxu0 0.0
    %1306 = vmatprep.subr.mxu0 0.0
    %1307 = vmatpush1.msra.mxu0 0.0
    %1308 = vmatprep.subr.mxu0 0.0
    %1309 = vmatpush1.msra.mxu0 0.0
    %1310 = vmatprep.subr.mxu0 0.0
    %1311 = vmatpush1.msra.mxu0 0.0
    %1312 = vmatprep.subr.mxu0 0.0
    %1313 = vmatpush1.msra.mxu0 0.0
    %1314 = vmatprep.subr.mxu0 0.0
    %1315 = vmatpush1.msra.mxu0 %v1283
    %1316 = vmatprep.subr.mxu0 0.0
    %1317 = vmatpush2.msra.mxu0 0.0
    %1318 = vmatprep.subr.mxu0 0.0
    %1319 = vmatpush2.msra.mxu0 0.0
    %1320 = vmatprep.subr.mxu0 0.0
    %1321 = vmatpush2.msra.mxu0 0.0
    %1322 = vmatprep.subr.mxu0 0.0
    %1323 = vmatpush2.msra.mxu0 0.0
    %1324 = vmatprep.subr.mxu0 0.0
    %1325 = vmatpush2.msra.mxu0 0.0
    %1326 = vmatprep.subr.mxu0 0.0
    %1327 = vmatpush2.msra.mxu0 0.0
    %1328 = vmatprep.subr.mxu0 0.0
    %1329 = vmatpush2.msra.mxu0 0.0
    %1330 = vmatprep.subr.mxu0 0.0
    %1331 = vmatpush2.msra.mxu0 0.0
    %1332 = vmatprep.subr.mxu0 0.0
    %1333 = vmatpush2.msra.mxu0 0.0
    %1334 = vmatprep.subr.mxu0 0.0
    %1335 = vmatpush2.msra.mxu0 0.0
    %1336 = vmatprep.subr.mxu0 0.0
    %1337 = vmatpush2.msra.mxu0 0.0
    %1338 = vmatprep.subr.mxu0 0.0
    %1339 = vmatpush2.msra.mxu0 0.0
    %1340 = vmatprep.subr.mxu0 0.0
    %1341 = vmatpush2.msra.mxu0 0.0
    %1342 = vmatprep.subr.mxu0 0.0
    %1343 = vmatpush2.msra.mxu0 0.0
    %1344 = vmatprep.subr.mxu0 0.0
    %1345 = vmatpush2.msra.mxu0 0.0
    %1346 = vmatprep.subr.mxu0 0.0
    %1347 = vmatpush2.msra.mxu0 0.0
    %1348 = vmatprep.mubr.f32.mxu0 0.0
    %1349 = vmatmul.mubr.f32.gmra.mxu0 %v166
    %v1350 = vpop.f32.mrf.mxu0
    %v1351 = vadd.f32 0.0, %v1350
    %v1352 = vpop.f32.mrf.mxu0
    %1353 = vdwg.mxu0
    %v1354 = vmul.f32 %v1280, 0.125
    %v1355 = vmul.f32 %v1351, 0.125
    %v1356 = vmul.f32 %v1354, %v1354
    %v1357 = vsub.f32 %v1355, %v1356
    %v1358 = vmax.f32 %v1357, 0.0
    %v1359 = vadd.f32 %v1358, 1e-05
    %v1360 = vrsqrt.pop %v1359
    %v1361 = vmul.f32 %v1211, %v1360
    %v1362 = vmul.f32 %v1354, %v1361
    %v1363 = vsub.f32 %v1212, %v1362
    %v1364 = vlaneseq
    %v1365 = vshrl.u32 %v1364, 7
    %v1366 = vsub.s32 0, %v1365
    %v1367 = vrot.slane %v1361, %v1366
    %v1368 = vmul.f32 %v1206, %v1367
    %v1369 = vlaneseq
    %v1370 = vshrl.u32 %v1369, 7
    %v1371 = vsub.s32 0, %v1370
    %v1372 = vrot.slane %v1363, %v1371
    %v1373 = vadd.f32 %v1368, %v1372
    %v1374 = vmax.f32 %v1373, 0.0
    %v1375 = vpack.c.bf16 %v1374, %v1374
    %v1376 = vld [vmem:[%s4] sm:$0xf]
    %v1377 = vld [vmem:[%s4 + $0x4] sm:$0xf]
    %v1378 = vld [vmem:[%s4 + $0x8] sm:$0xf]
    %v1379 = vld [vmem:[%s4 + $0xc] sm:$0xf]
    %v1380 = vld [vmem:[%s4 + $0x10] sm:$0xf]
    %v1381 = vld [vmem:[%s4 + $0x14] sm:$0xf]
    %v1382 = vld [vmem:[%s4 + $0x18] sm:$0xf]
    %v1383 = vld [vmem:[%s4 + $0x1c] sm:$0xf]
    %v1384 = vld [vmem:[%s4 + $0x20] sm:$0xf]
    %v1385 = vld [vmem:[%s4 + $0x24] sm:$0xf]
    %v1386 = vld [vmem:[%s4 + $0x28] sm:$0xf]
    %v1387 = vld [vmem:[%s4 + $0x2c] sm:$0xf]
    %v1388 = vld [vmem:[%s4 + $0x30] sm:$0xf]
    %v1389 = vld [vmem:[%s4 + $0x34] sm:$0xf]
    %v1390 = vld [vmem:[%s4 + $0x38] sm:$0xf]
    %v1391 = vld [vmem:[%s4 + $0x3c] sm:$0xf]
    %v1392 = vld [vmem:[%s5 + $0x6] ss:$0 sm:$0xff]
    %v1409 = vunpack.c.l.b16 %v1376
    %v1410 = vunpack.c.l.b16 %v1377
    %v1411 = vunpack.c.l.b16 %v1378
    %v1412 = vunpack.c.l.b16 %v1379
    %v1413 = vunpack.c.l.b16 %v1380
    %v1414 = vunpack.c.l.b16 %v1381
    %v1415 = vunpack.c.l.b16 %v1382
    %v1416 = vunpack.c.l.b16 %v1383
    %v1417 = vunpack.c.l.b16 %v1384
    %v1418 = vunpack.c.l.b16 %v1385
    %v1419 = vunpack.c.l.b16 %v1386
    %v1420 = vunpack.c.l.b16 %v1387
    %v1421 = vunpack.c.l.b16 %v1388
    %v1422 = vunpack.c.l.b16 %v1389
    %v1423 = vunpack.c.l.b16 %v1390
    %v1424 = vunpack.c.l.b16 %v1391
    %v1425 = vpack.c.b16 %v1410, %v1409
    %v1426 = vpack.c.b16 %v1412, %v1411
    %v1427 = vpack.c.b16 %v1414, %v1413
    %v1428 = vpack.c.b16 %v1416, %v1415
    %v1429 = vpack.c.b16 %v1418, %v1417
    %v1430 = vpack.c.b16 %v1420, %v1419
    %v1431 = vpack.c.b16 %v1422, %v1421
    %v1432 = vpack.c.b16 %v1424, %v1423
    %1441 = vmatprep.subr.bf16.mxu0 0
    %1442 = vmatpush1.bf16.msra.mxu0 %v1432
    %1443 = vmatprep.subr.bf16.mxu0 0
    %1444 = vmatpush1.bf16.msra.mxu0 %v1431
    %1445 = vmatprep.subr.bf16.mxu0 0
    %1446 = vmatpush1.bf16.msra.mxu0 %v1430
    %1447 = vmatprep.subr.bf16.mxu0 0
    %1448 = vmatpush1.bf16.msra.mxu0 %v1429
    %1449 = vmatprep.subr.bf16.mxu0 0
    %1450 = vmatpush1.bf16.msra.mxu0 %v1428
    %1451 = vmatprep.subr.bf16.mxu0 0
    %1452 = vmatpush1.bf16.msra.mxu0 %v1427
    %1453 = vmatprep.subr.bf16.mxu0 0
    %1454 = vmatpush1.bf16.msra.mxu0 %v1426
    %1455 = vmatprep.subr.bf16.mxu0 0
    %1456 = vmatpush1.bf16.msra.mxu0 %v1425
    %1457 = vmatprep.subr.bf16.mxu0 0
    %1458 = vmatpush2.bf16.msra.mxu0 0
    %1459 = vmatprep.subr.bf16.mxu0 0
    %1460 = vmatpush2.bf16.msra.mxu0 0
    %1461 = vmatprep.subr.bf16.mxu0 0
    %1462 = vmatpush2.bf16.msra.mxu0 0
    %1463 = vmatprep.subr.bf16.mxu0 0
    %1464 = vmatpush2.bf16.msra.mxu0 0
    %1465 = vmatprep.subr.bf16.mxu0 0
    %1466 = vmatpush2.bf16.msra.mxu0 0
    %1467 = vmatprep.subr.bf16.mxu0 0
    %1468 = vmatpush2.bf16.msra.mxu0 0
    %1469 = vmatprep.subr.bf16.mxu0 0
    %1470 = vmatpush2.bf16.msra.mxu0 0
    %1471 = vmatprep.subr.bf16.mxu0 0
    %1472 = vmatpush2.bf16.msra.mxu0 0
    %1473 = vmatprep.mubr.bf16.mxu0 0
    %1474 = vmatmul.mubr.bf16.gmra.mxu0 %v1375
    %v1475 = vpop.f32.mrf.mxu0
    %v1476 = vadd.f32 %v1392, %v1475
    %v1477 = vpop.f32.mrf.mxu0
    %v1478 = vpop.f32.mrf.mxu0
    %v1479 = vpop.f32.mrf.mxu0
    %1480 = vdwg.mxu0
    %1481 = vst [vmem:[#allocation2] sm:$0xff] %v1476
    // Predicated region
    $region26: #{multiclass_forward.1} parent=1 // pred_check
      _
    $region27: #{multiclass_forward.1} parent=1 // pred_check_branch
      %1483 = sbr.rel (0) target = $region29
    $region28: #{multiclass_forward.1} parent=1 // pred_region
      %s1485 = ssub.s32 128, 128
      %1486 = vsyncadd [#allocation3], %s1485
      %s1488 = sshll.u32 [#allocation2], 4
      %s1489 = int_to_ptr.vmem [resolvable:$true] %s1488
      %1491 = dma.vmem_to_hbm [thread:$0]  %s1489, 128, %s6, [#allocation3]
    $region29: #{multiclass_forward.1} parent=1 // pred_fallthru
      _
    // Predicated region
    $region30: #{multiclass_forward.1} parent=1 // pred_check
      _
    $region31: #{multiclass_forward.1} parent=1 // pred_check_branch
      %1493 = sbr.rel (0) target = $region33
    $region32: #{multiclass_forward.1} parent=1 // pred_region
      %1494 = dma.done [#allocation3], 128
    $region33: #{multiclass_forward.1} parent=1 // pred_fallthru
      _
    %1495 = vsyncpa [#allocation3], 1

</llo_original>
